<compile_context>
chip_gen: v7x
topology: tpu7x:2x2x1
jax: 0.10.0
libtpu: 0.0.40
codegen_flags: <defaults>
</compile_context>

<pallas_src>
import math
import functools

import jax
import jax.numpy as jnp
from jax.experimental import pallas as pl
from jax.experimental.pallas import tpu as pltpu

# ------------------------------ configuration ------------------------------

COMPUTE_DTYPE = jnp.bfloat16          # MXU operand / activation dtype (f32 accum)
LN_EPS = 1e-5

TM, TN, TK = 256, 512, 1024           # matmul tiles (rows, cols, contraction)
TS = 256                              # attention q / kv sequence tile


def _default_vmem_limit():
    """Scoped VMEM limit: generous on v5e/v6e (128 MiB), capped for v7x (64 MiB)."""
    cap = 64 * 1024 * 1024
    try:
        cap = int(getattr(pltpu.get_tpu_info(), "vmem_capacity_bytes", cap))
    except Exception:
        pass
    return max(32 * 1024 * 1024, min(cap - 16 * 1024 * 1024, 100 * 1024 * 1024))


VMEM_LIMIT = _default_vmem_limit()


def _round_up(x, m):
    return ((x + m - 1) // m) * m


def _pick_tile(dim, max_tile, unit):
    """Full-extent block for small dims (no padding); otherwise a tile that
    divides dim when possible, else max_tile (caller zero-pads once)."""
    if dim <= max_tile:
        return dim
    t = max_tile
    while t > unit and dim % t:
        t //= 2
    return t if dim % t == 0 else max_tile


def _pad2d(a, rows, cols):
    pr, pc = rows - a.shape[0], cols - a.shape[1]
    if pr or pc:
        a = jnp.pad(a, ((0, pr), (0, pc)))
    return a


# ------------------- tiled matmul (+bias / gelu / residual) -----------------

def _matmul_kernel(*refs, activation, has_residual):
    if has_residual:
        x_ref, w_ref, b_ref, r_ref, o_ref, acc_ref = refs
    else:
        x_ref, w_ref, b_ref, o_ref, acc_ref = refs
        r_ref = None

    @pl.when(pl.program_id(2) == 0)
    def _():
        acc_ref[...] = jnp.zeros_like(acc_ref)

    acc_ref[...] += jnp.dot(x_ref[...], w_ref[...],
                            preferred_element_type=jnp.float32)

    @pl.when(pl.program_id(2) == pl.num_programs(2) - 1)
    def _():
        y = acc_ref[...] + b_ref[...].astype(jnp.float32)
        if activation == "gelu":
            # exact (erf) GELU, matching torch.nn.functional.gelu default
            y = 0.5 * y * (1.0 + jax.lax.erf(y * (1.0 / math.sqrt(2.0))))
        if has_residual:
            y = y + r_ref[...].astype(jnp.float32)
        o_ref[...] = y.astype(o_ref.dtype)


def linear(x, w, b, residual=None, activation=None, out_dtype=COMPUTE_DTYPE):
    """y = activation(x @ w + b) [+ residual], K-tiled with an f32 accumulator."""
    M, K = x.shape
    N = w.shape[1]
    tm = _pick_tile(M, TM, 8)
    tn = _pick_tile(N, TN, 128)
    tk = _pick_tile(K, TK, 128)
    Mp, Np, Kp = _round_up(M, tm), _round_up(N, tn), _round_up(K, tk)

    operands = [_pad2d(x, Mp, Kp), _pad2d(w, Kp, Np), _pad2d(b, 1, Np)]
    in_specs = [pl.BlockSpec((tm, tk), lambda i, j, k: (i, k)),
                pl.BlockSpec((tk, tn), lambda i, j, k: (k, j)),
                pl.BlockSpec((1, tn), lambda i, j, k: (0, j))]
    if residual is not None:
        operands.append(_pad2d(residual, Mp, Np))
        in_specs.append(pl.BlockSpec((tm, tn), lambda i, j, k: (i, j)))

    kern = functools.partial(_matmul_kernel, activation=activation,
                             has_residual=residual is not None)
    out = pl.pallas_call(
        kern,
        grid=(Mp // tm, Np // tn, Kp // tk),
        in_specs=in_specs,
        out_specs=pl.BlockSpec((tm, tn), lambda i, j, k: (i, j)),
        out_shape=jax.ShapeDtypeStruct((Mp, Np), out_dtype),
        scratch_shapes=[pltpu.VMEM((tm, tn), jnp.float32)],
        compiler_params=pltpu.CompilerParams(
            dimension_semantics=("parallel", "parallel", "arbitrary"),
            vmem_limit_bytes=VMEM_LIMIT),
    )(*operands)
    if Mp != M or Np != N:
        out = out[:M, :N]
    return out


# ------------------------- fused LayerNorm + matmul --------------------------

def _ln_matmul_kernel(x_ref, g_ref, bln_ref, w_ref, b_ref, o_ref, xn_ref,
                      *, activation, eps):
    # LayerNorm of the (tm, K) row tile is computed once per row block
    # (innermost grid axis j == 0) and reused for every output-column tile.
    @pl.when(pl.program_id(1) == 0)
    def _():
        x = x_ref[...].astype(jnp.float32)
        mean = jnp.mean(x, axis=-1, keepdims=True)
        xc = x - mean
        var = jnp.mean(xc * xc, axis=-1, keepdims=True)
        xn = xc * jax.lax.rsqrt(var + eps)
        xn = xn * g_ref[...].astype(jnp.float32) + bln_ref[...].astype(jnp.float32)
        xn_ref[...] = xn.astype(xn_ref.dtype)

    y = jnp.dot(xn_ref[...], w_ref[...], preferred_element_type=jnp.float32)
    y = y + b_ref[...].astype(jnp.float32)
    if activation == "gelu":
        y = 0.5 * y * (1.0 + jax.lax.erf(y * (1.0 / math.sqrt(2.0))))
    o_ref[...] = y.astype(o_ref.dtype)


def ln_linear(x, g, bln, w, b, activation=None, out_dtype=COMPUTE_DTYPE,
              eps=LN_EPS):
    """activation(LayerNorm(x) @ w + b): LN fused into the matmul prologue.

    K (feature dim) stays a single full block so LN statistics are exact; the
    normalized bf16 tile lives in VMEM scratch for the whole row block.
    """
    M, K = x.shape
    N = w.shape[1]
    tm = _pick_tile(M, TM, 8)
    tn = _pick_tile(N, TN, 128)
    Mp, Np = _round_up(M, tm), _round_up(N, tn)

    kern = functools.partial(_ln_matmul_kernel, activation=activation, eps=eps)
    out = pl.pallas_call(
        kern,
        grid=(Mp // tm, Np // tn),
        in_specs=[pl.BlockSpec((tm, K), lambda i, j: (i, 0)),
                  pl.BlockSpec((1, K), lambda i, j: (0, 0)),
                  pl.BlockSpec((1, K), lambda i, j: (0, 0)),
                  pl.BlockSpec((K, tn), lambda i, j: (0, j)),
                  pl.BlockSpec((1, tn), lambda i, j: (0, j))],
        out_specs=pl.BlockSpec((tm, tn), lambda i, j: (i, j)),
        out_shape=jax.ShapeDtypeStruct((Mp, Np), out_dtype),
        scratch_shapes=[pltpu.VMEM((tm, K), COMPUTE_DTYPE)],
        compiler_params=pltpu.CompilerParams(
            dimension_semantics=("parallel", "arbitrary"),
            vmem_limit_bytes=VMEM_LIMIT),
    )(_pad2d(x, Mp, K), g, bln, _pad2d(w, K, Np), _pad2d(b, 1, Np))
    if Mp != M or Np != N:
        out = out[:M, :N]
    return out


# ------------------------- flash attention (causal) --------------------------

def _flash_attn_kernel(q_ref, k_ref, v_ref, o_ref, m_sc, l_sc, acc_sc,
                       *, scale, tq, tkv):
    qi = pl.program_id(1)
    ki = pl.program_id(2)

    @pl.when(ki == 0)
    def _():
        m_sc[...] = jnp.full_like(m_sc, -1e30)   # finite sentinel (NaN-safe)
        l_sc[...] = jnp.zeros_like(l_sc)
        acc_sc[...] = jnp.zeros_like(acc_sc)

    q_start = qi * tq
    k_start = ki * tkv

    # Skip KV tiles entirely above the causal diagonal (their DMAs are also
    # elided by the clamped kv index_map in the wrapper).
    @pl.when(k_start < q_start + tq)
    def _():
        q = q_ref[0]                              # (tq, hd)  bf16 MXU operand
        k = k_ref[0]                              # (tkv, hd) bf16 MXU operand
        s = jax.lax.dot_general(q, k, (((1,), (1,)), ((), ())),
                                preferred_element_type=jnp.float32)
        s = s * scale                             # scale applied to f32 scores
        row = q_start + jax.lax.broadcasted_iota(jnp.int32, (tq, tkv), 0)
        col = k_start + jax.lax.broadcasted_iota(jnp.int32, (tq, tkv), 1)
        s = jnp.where(col > row, -1e30, s)

        m_prev = m_sc[...]                        # (tq, 1)
        m_new = jnp.maximum(m_prev, jnp.max(s, axis=-1, keepdims=True))
        alpha = jnp.exp(m_prev - m_new)
        p = jnp.exp(s - m_new)
        l_sc[...] = alpha * l_sc[...] + jnp.sum(p, axis=-1, keepdims=True)
        acc_sc[...] = alpha * acc_sc[...] + jnp.dot(
            p.astype(v_ref.dtype), v_ref[0], preferred_element_type=jnp.float32)
        m_sc[...] = m_new

    @pl.when(ki == pl.num_programs(2) - 1)
    def _():
        o_ref[0] = (acc_sc[...] * pl.reciprocal(l_sc[...], approx=True)
                    ).astype(o_ref.dtype)         # single lane-dense store


def flash_attention(q, k, v, tile):
    """Causal MHA.  q, k, v: (B*H, S, head_dim), S a multiple of `tile`."""
    BH, S, hd = q.shape
    t = tile
    nblk = S // t
    scale = 1.0 / math.sqrt(hd)

    kern = functools.partial(_flash_attn_kernel, scale=scale, tq=t, tkv=t)
    q_spec = pl.BlockSpec((1, t, hd), lambda b, i, j: (b, i, 0))
    # Clamp the KV block index so causally-skipped steps revisit the previous
    # block -> their K/V DMAs become no-ops (≈2x less KV HBM traffic).
    kv_spec = pl.BlockSpec((1, t, hd), lambda b, i, j: (b, jnp.minimum(j, i), 0))
    return pl.pallas_call(
        kern,
        grid=(BH, nblk, nblk),
        in_specs=[q_spec, kv_spec, kv_spec],
        out_specs=pl.BlockSpec((1, t, hd), lambda b, i, j: (b, i, 0)),
        out_shape=jax.ShapeDtypeStruct((BH, S, hd), q.dtype),
        scratch_shapes=[pltpu.VMEM((t, 1), jnp.float32),    # running max
                        pltpu.VMEM((t, 1), jnp.float32),    # running sum
                        pltpu.VMEM((t, hd), jnp.float32)],  # output accum
        compiler_params=pltpu.CompilerParams(
            dimension_semantics=("parallel", "parallel", "arbitrary"),
            vmem_limit_bytes=VMEM_LIMIT),
    )(q, k, v)


# ------------------------------ model (glue) ---------------------------------

def init_params(key, vocab_size, embed_dim, nhead, num_layers,
                dim_feedforward, max_seq_len, dtype=COMPUTE_DTYPE):
    ks = jax.random.split(key, 2 + num_layers)

    def nrm(k, shape, scale=0.02):
        return (scale * jax.random.normal(k, shape, jnp.float32)).astype(dtype)

    params = {
        "tok_emb": nrm(ks[0], (vocab_size, embed_dim), 1.0),
        # nn.Parameter(torch.zeros(1, max_seq_len, embed_dim))
        "pos": jnp.zeros((1, max_seq_len, embed_dim), dtype),
        "lm_head_w": nrm(ks[1], (embed_dim, vocab_size)),
        "lm_head_b": jnp.zeros((1, vocab_size), jnp.float32),
        "final_ln_g": jnp.ones((1, embed_dim), jnp.float32),
        "final_ln_b": jnp.zeros((1, embed_dim), jnp.float32),
        "layers": [],
    }
    for l in range(num_layers):
        lk = jax.random.split(ks[2 + l], 4)
        params["layers"].append({
            "ln1_g": jnp.ones((1, embed_dim), jnp.float32),
            "ln1_b": jnp.zeros((1, embed_dim), jnp.float32),
            # packed [wq | wk | wv] columns == torch's packed in_proj_weight.T
            "w_qkv": nrm(lk[0], (embed_dim, 3 * embed_dim)),
            "b_qkv": jnp.zeros((1, 3 * embed_dim), jnp.float32),
            "out_proj_w": nrm(lk[1], (embed_dim, embed_dim)),
            "out_proj_b": jnp.zeros((1, embed_dim), jnp.float32),
            "ln2_g": jnp.ones((1, embed_dim), jnp.float32),
            "ln2_b": jnp.zeros((1, embed_dim), jnp.float32),
            "ff1_w": nrm(lk[2], (embed_dim, dim_feedforward)),
            "ff1_b": jnp.zeros((1, dim_feedforward), jnp.float32),
            "ff2_w": nrm(lk[3], (dim_feedforward, embed_dim)),
            "ff2_b": jnp.zeros((1, embed_dim), jnp.float32),
        })
    return params


def forward(params, tokens, nhead):
    B, S0 = tokens.shape
    max_seq_len = params["pos"].shape[1]
    if S0 > max_seq_len:                    # torch: keep only the last max_seq_len
        tokens = tokens[:, -max_seq_len:]
        S0 = max_seq_len
    D = params["tok_emb"].shape[1]
    head_dim = D // nhead

    # embedding lookup (gather glue) * sqrt(D) + learned positional encoding
    x = jnp.take(params["tok_emb"], tokens, axis=0).astype(jnp.float32) * math.sqrt(D)
    x = x + params["pos"][:, :S0, :].astype(jnp.float32)
    # TODO(synk): dropout treated as identity (inference semantics).

    # Pad the sequence ONCE to a multiple of the attention tile; zero padding
    # is exact through matmul, padded keys are masked by causality, padded
    # rows are sliced off at the end.
    t = min(TS, _round_up(S0, 8))
    S = _round_up(S0, t)
    if S != S0:
        x = jnp.pad(x, ((0, 0), (0, S - S0), (0, 0)))
    x = x.reshape(B * S, D).astype(COMPUTE_DTYPE)

    for lyr in params["layers"]:
        # --- self-attention block (pre-LN); LN fused into ONE packed QKV proj ---
        qkv = ln_linear(x, lyr["ln1_g"], lyr["ln1_b"], lyr["w_qkv"], lyr["b_qkv"])
        qkv = qkv.reshape(B, S, 3, nhead, head_dim)
        qkv = qkv.transpose(2, 0, 3, 1, 4).reshape(3, B * nhead, S, head_dim)
        ao = flash_attention(qkv[0], qkv[1], qkv[2], tile=t)   # (B*H, S, hd)
        ao = ao.reshape(B, nhead, S, head_dim).transpose(0, 2, 1, 3)
        ao = ao.reshape(B * S, D)
        # output projection with the residual add fused into its epilogue
        x = linear(ao, lyr["out_proj_w"], lyr["out_proj_b"], residual=x)

        # --- feedforward block (pre-LN); LN fused into FF1, residual into FF2 ---
        h = ln_linear(x, lyr["ln2_g"], lyr["ln2_b"], lyr["ff1_w"], lyr["ff1_b"],
                      activation="gelu")
        x = linear(h, lyr["ff2_w"], lyr["ff2_b"], residual=x)

    # final encoder LayerNorm fused with the LM head
    logits = ln_linear(x, params["final_ln_g"], params["final_ln_b"],
                       params["lm_head_w"], params["lm_head_b"],
                       out_dtype=jnp.float32)
    logits = logits.reshape(B, S, -1)
    if S != S0:
        logits = logits[:, :S0, :]
    return logits


if __name__ == "__main__":
    vocab_size = 128
    embed_dim = 32
    nhead = 4
    num_layers = 2
    dim_feedforward = 64
    max_seq_len = 16
    B, S = 2, 8

    key = jax.random.PRNGKey(0)
    pkey, tkey = jax.random.split(key)
    params = init_params(pkey, vocab_size, embed_dim, nhead, num_layers,
                         dim_feedforward, max_seq_len)
    tokens = jax.random.randint(tkey, (B, S), 0, vocab_size, dtype=jnp.int32)

    fwd = jax.jit(functools.partial(forward, nhead=nhead))
    logits = fwd(params, tokens)
    jax.block_until_ready(logits)
    assert logits.shape == (B, S, vocab_size), logits.shape
    assert bool(jnp.all(jnp.isfinite(logits)))
    print("KERNEL_OK")
</pallas_src>

<mosaic_0001>
module attributes {stable_mosaic.version = 11 : i64} {
  func.func @_ln_matmul_kernel(%arg0: i32, %arg1: i32, %arg2: memref<16x32xbf16, #tpu.memory_space<vmem>>, %arg3: memref<1x32xf32, #tpu.memory_space<vmem>>, %arg4: memref<1x32xf32, #tpu.memory_space<vmem>>, %arg5: memref<32x96xbf16, #tpu.memory_space<vmem>>, %arg6: memref<1x96xf32, #tpu.memory_space<vmem>>, %arg7: memref<16x96xbf16, #tpu.memory_space<vmem>>, %arg8: memref<16x32xbf16, #tpu.memory_space<vmem>>) attributes {dimension_semantics = [#tpu.dimension_semantics<parallel>, #tpu.dimension_semantics<arbitrary>], iteration_bounds = array<i64: 1, 1>, scalar_prefetch = 0 : i64, scratch_operands = 1 : i64, tpu.core_type = #tpu.core_type<tc>, window_params = [{transform_indices = @transform_0, window_bounds = array<i64: 16, 32>}, {pipeline_mode = #tpu.pipeline_mode<synchronous>, transform_indices = @transform_1, window_bounds = array<i64: 1, 32>}, {pipeline_mode = #tpu.pipeline_mode<synchronous>, transform_indices = @transform_2, window_bounds = array<i64: 1, 32>}, {transform_indices = @transform_3, window_bounds = array<i64: 32, 96>}, {transform_indices = @transform_4, window_bounds = array<i64: 1, 96>}, {transform_indices = @transform_5, window_bounds = array<i64: 16, 96>}]} {
    %c0_i32 = arith.constant 0 : i32
    %0 = arith.cmpi eq, %arg1, %c0_i32 : i32
    %1 = arith.extui %0 : i1 to i32
    %c0_i32_0 = arith.constant 0 : i32
    %2 = arith.cmpi ne, %1, %c0_i32_0 : i32
    scf.if %2 {
      %c0_8 = arith.constant 0 : index
      %c0_9 = arith.constant 0 : index
      %11 = vector.load %arg2[%c0_8, %c0_9] : memref<16x32xbf16, #tpu.memory_space<vmem>>, vector<16x32xbf16>
      %12 = arith.extf %11 : vector<16x32xbf16> to vector<16x32xf32>
      %cst_10 = arith.constant dense<0.000000e+00> : vector<16xf32>
      %13 = vector.multi_reduction <add>, %12, %cst_10 [1] : vector<16x32xf32> to vector<16xf32>
      %14 = vector.shape_cast %13 : vector<16xf32> to vector<16x1xf32>
      %cst_11 = arith.constant 3.200000e+01 : f32
      %15 = vector.broadcast %cst_11 : f32 to vector<16x1xf32>
      %16 = arith.divf %14, %15 : vector<16x1xf32>
      %17 = vector.broadcast %16 : vector<16x1xf32> to vector<16x32xf32>
      %18 = arith.subf %12, %17 : vector<16x32xf32>
      %19 = arith.mulf %18, %18 : vector<16x32xf32>
      %cst_12 = arith.constant dense<0.000000e+00> : vector<16xf32>
      %20 = vector.multi_reduction <add>, %19, %cst_12 [1] : vector<16x32xf32> to vector<16xf32>
      %21 = vector.shape_cast %20 : vector<16xf32> to vector<16x1xf32>
      %cst_13 = arith.constant 3.200000e+01 : f32
      %22 = vector.broadcast %cst_13 : f32 to vector<16x1xf32>
      %23 = arith.divf %21, %22 : vector<16x1xf32>
      %cst_14 = arith.constant 9.99999974E-6 : f32
      %24 = vector.broadcast %cst_14 : f32 to vector<16x1xf32>
      %25 = arith.addf %23, %24 : vector<16x1xf32>
      %26 = math.rsqrt %25 : vector<16x1xf32>
      %27 = vector.broadcast %26 : vector<16x1xf32> to vector<16x32xf32>
      %28 = arith.mulf %18, %27 : vector<16x32xf32>
      %c0_15 = arith.constant 0 : index
      %c0_16 = arith.constant 0 : index
      %29 = vector.load %arg3[%c0_15, %c0_16] : memref<1x32xf32, #tpu.memory_space<vmem>>, vector<1x32xf32>
      %30 = vector.broadcast %29 : vector<1x32xf32> to vector<16x32xf32>
      %31 = arith.mulf %28, %30 : vector<16x32xf32>
      %c0_17 = arith.constant 0 : index
      %c0_18 = arith.constant 0 : index
      %32 = vector.load %arg4[%c0_17, %c0_18] : memref<1x32xf32, #tpu.memory_space<vmem>>, vector<1x32xf32>
      %33 = vector.broadcast %32 : vector<1x32xf32> to vector<16x32xf32>
      %34 = arith.addf %31, %33 : vector<16x32xf32>
      %35 = arith.truncf %34 : vector<16x32xf32> to vector<16x32xbf16>
      %c0_19 = arith.constant 0 : index
      %c0_20 = arith.constant 0 : index
      %36 = vector.load %arg8[%c0_19, %c0_20] : memref<16x32xbf16, #tpu.memory_space<vmem>>, vector<16x32xbf16>
      tpu.vector_store %arg8[%c0_19, %c0_20], %35 {strides = array<i32>} : memref<16x32xbf16, #tpu.memory_space<vmem>>, vector<16x32xbf16>,
    } else {
    }
    %c0 = arith.constant 0 : index
    %c0_1 = arith.constant 0 : index
    %3 = vector.load %arg8[%c0, %c0_1] : memref<16x32xbf16, #tpu.memory_space<vmem>>, vector<16x32xbf16>
    %c0_2 = arith.constant 0 : index
    %c0_3 = arith.constant 0 : index
    %4 = vector.load %arg5[%c0_2, %c0_3] : memref<32x96xbf16, #tpu.memory_space<vmem>>, vector<32x96xbf16>
    %cst = arith.constant dense<0.000000e+00> : vector<16x96xf32>
    %5 = tpu.matmul %3, %4, %cst {dimension_numbers = #tpu.dot_dimension_numbers<[1], [0], [0], [1], [0, 0, 1, 1], [], []>} : vector<16x32xbf16>, vector<32x96xbf16>, vector<16x96xf32> -> vector<16x96xf32>
    %c0_4 = arith.constant 0 : index
    %c0_5 = arith.constant 0 : index
    %6 = vector.load %arg6[%c0_4, %c0_5] : memref<1x96xf32, #tpu.memory_space<vmem>>, vector<1x96xf32>
    %7 = vector.broadcast %6 : vector<1x96xf32> to vector<16x96xf32>
    %8 = arith.addf %5, %7 : vector<16x96xf32>
    %9 = arith.truncf %8 : vector<16x96xf32> to vector<16x96xbf16>
    %c0_6 = arith.constant 0 : index
    %c0_7 = arith.constant 0 : index
    %10 = vector.load %arg7[%c0_6, %c0_7] : memref<16x96xbf16, #tpu.memory_space<vmem>>, vector<16x96xbf16>
    tpu.vector_store %arg7[%c0_6, %c0_7], %9 {strides = array<i32>} : memref<16x96xbf16, #tpu.memory_space<vmem>>, vector<16x96xbf16>,
    return
  }
  func.func @transform_0(%arg0: i32, %arg1: i32) -> (i32, i32) {
    %c0_i32 = arith.constant 0 : i32
    %c0_i32_0 = arith.constant 0 : i32
    return %arg0, %c0_i32 : i32, i32
  }
  func.func @transform_1(%arg0: i32, %arg1: i32) -> (i32, i32) {
    %c0_i32 = arith.constant 0 : i32
    %c0_i32_0 = arith.constant 0 : i32
    %c0_i32_1 = arith.constant 0 : i32
    return %c0_i32, %c0_i32_0 : i32, i32
  }
  func.func @transform_2(%arg0: i32, %arg1: i32) -> (i32, i32) {
    %c0_i32 = arith.constant 0 : i32
    %c0_i32_0 = arith.constant 0 : i32
    %c0_i32_1 = arith.constant 0 : i32
    return %c0_i32, %c0_i32_0 : i32, i32
  }
  func.func @transform_3(%arg0: i32, %arg1: i32) -> (i32, i32) {
    %c0_i32 = arith.constant 0 : i32
    %c0_i32_0 = arith.constant 0 : i32
    return %c0_i32, %arg1 : i32, i32
  }
  func.func @transform_4(%arg0: i32, %arg1: i32) -> (i32, i32) {
    %c0_i32 = arith.constant 0 : i32
    %c0_i32_0 = arith.constant 0 : i32
    return %c0_i32, %arg1 : i32, i32
  }
  func.func @transform_5(%arg0: i32, %arg1: i32) -> (i32, i32) {
    %c0_i32 = arith.constant 0 : i32
    return %arg0, %arg1 : i32, i32
  }
}

module attributes {stable_mosaic.version = 11 : i64} {
  func.func @_matmul_kernel(%arg0: i32, %arg1: i32, %arg2: i32, %arg3: memref<16x32xbf16, #tpu.memory_space<vmem>>, %arg4: memref<32x32xbf16, #tpu.memory_space<vmem>>, %arg5: memref<1x32xf32, #tpu.memory_space<vmem>>, %arg6: memref<16x32xbf16, #tpu.memory_space<vmem>>, %arg7: memref<16x32xbf16, #tpu.memory_space<vmem>>, %arg8: memref<16x32xf32, #tpu.memory_space<vmem>>) attributes {dimension_semantics = [#tpu.dimension_semantics<parallel>, #tpu.dimension_semantics<parallel>, #tpu.dimension_semantics<arbitrary>], iteration_bounds = array<i64: 1, 1, 1>, scalar_prefetch = 0 : i64, scratch_operands = 1 : i64, tpu.core_type = #tpu.core_type<tc>, window_params = [{transform_indices = @transform_0, window_bounds = array<i64: 16, 32>}, {transform_indices = @transform_1, window_bounds = array<i64: 32, 32>}, {transform_indices = @transform_2, window_bounds = array<i64: 1, 32>}, {transform_indices = @transform_3, window_bounds = array<i64: 16, 32>}, {transform_indices = @transform_4, window_bounds = array<i64: 16, 32>}]} {
    %c0_i32 = arith.constant 0 : i32
    %0 = arith.cmpi eq, %arg2, %c0_i32 : i32
    %1 = arith.extui %0 : i1 to i32
    %c0_i32_0 = arith.constant 0 : i32
    %2 = arith.cmpi ne, %1, %c0_i32_0 : i32
    scf.if %2 {
      %cst_10 = arith.constant 0.000000e+00 : f32
      %12 = vector.broadcast %cst_10 : f32 to vector<16x32xf32>
      %c0_11 = arith.constant 0 : index
      %c0_12 = arith.constant 0 : index
      %13 = vector.load %arg8[%c0_11, %c0_12] : memref<16x32xf32, #tpu.memory_space<vmem>>, vector<16x32xf32>
      tpu.vector_store %arg8[%c0_11, %c0_12], %12 {strides = array<i32>} : memref<16x32xf32, #tpu.memory_space<vmem>>, vector<16x32xf32>,
    } else {
    }
    %c0 = arith.constant 0 : index
    %c0_1 = arith.constant 0 : index
    %3 = vector.load %arg8[%c0, %c0_1] : memref<16x32xf32, #tpu.memory_space<vmem>>, vector<16x32xf32>
    %c0_2 = arith.constant 0 : index
    %c0_3 = arith.constant 0 : index
    %4 = vector.load %arg3[%c0_2, %c0_3] : memref<16x32xbf16, #tpu.memory_space<vmem>>, vector<16x32xbf16>
    %c0_4 = arith.constant 0 : index
    %c0_5 = arith.constant 0 : index
    %5 = vector.load %arg4[%c0_4, %c0_5] : memref<32x32xbf16, #tpu.memory_space<vmem>>, vector<32x32xbf16>
    %cst = arith.constant dense<0.000000e+00> : vector<16x32xf32>
    %6 = tpu.matmul %4, %5, %cst {dimension_numbers = #tpu.dot_dimension_numbers<[1], [0], [0], [1], [0, 0, 1, 1], [], []>} : vector<16x32xbf16>, vector<32x32xbf16>, vector<16x32xf32> -> vector<16x32xf32>
    %7 = arith.addf %3, %6 : vector<16x32xf32>
    %c0_6 = arith.constant 0 : index
    %c0_7 = arith.constant 0 : index
    %8 = vector.load %arg8[%c0_6, %c0_7] : memref<16x32xf32, #tpu.memory_space<vmem>>, vector<16x32xf32>
    tpu.vector_store %arg8[%c0_6, %c0_7], %7 {strides = array<i32>} : memref<16x32xf32, #tpu.memory_space<vmem>>, vector<16x32xf32>,
    %c0_i32_8 = arith.constant 0 : i32
    %9 = arith.cmpi eq, %arg2, %c0_i32_8 : i32
    %10 = arith.extui %9 : i1 to i32
    %c0_i32_9 = arith.constant 0 : i32
    %11 = arith.cmpi ne, %10, %c0_i32_9 : i32
    scf.if %11 {
      %c0_10 = arith.constant 0 : index
      %c0_11 = arith.constant 0 : index
      %12 = vector.load %arg8[%c0_10, %c0_11] : memref<16x32xf32, #tpu.memory_space<vmem>>, vector<16x32xf32>
      %c0_12 = arith.constant 0 : index
      %c0_13 = arith.constant 0 : index
      %13 = vector.load %arg5[%c0_12, %c0_13] : memref<1x32xf32, #tpu.memory_space<vmem>>, vector<1x32xf32>
      %14 = vector.broadcast %13 : vector<1x32xf32> to vector<16x32xf32>
      %15 = arith.addf %12, %14 : vector<16x32xf32>
      %c0_14 = arith.constant 0 : index
      %c0_15 = arith.constant 0 : index
      %16 = vector.load %arg6[%c0_14, %c0_15] : memref<16x32xbf16, #tpu.memory_space<vmem>>, vector<16x32xbf16>
      %17 = arith.extf %16 : vector<16x32xbf16> to vector<16x32xf32>
      %18 = arith.addf %15, %17 : vector<16x32xf32>
      %19 = arith.truncf %18 : vector<16x32xf32> to vector<16x32xbf16>
      %c0_16 = arith.constant 0 : index
      %c0_17 = arith.constant 0 : index
      %20 = vector.load %arg7[%c0_16, %c0_17] : memref<16x32xbf16, #tpu.memory_space<vmem>>, vector<16x32xbf16>
      tpu.vector_store %arg7[%c0_16, %c0_17], %19 {strides = array<i32>} : memref<16x32xbf16, #tpu.memory_space<vmem>>, vector<16x32xbf16>,
    } else {
    }
    return
  }
  func.func @transform_0(%arg0: i32, %arg1: i32, %arg2: i32) -> (i32, i32) {
    %c0_i32 = arith.constant 0 : i32
    return %arg0, %arg2 : i32, i32
  }
  func.func @transform_1(%arg0: i32, %arg1: i32, %arg2: i32) -> (i32, i32) {
    %c0_i32 = arith.constant 0 : i32
    return %arg2, %arg1 : i32, i32
  }
  func.func @transform_2(%arg0: i32, %arg1: i32, %arg2: i32) -> (i32, i32) {
    %c0_i32 = arith.constant 0 : i32
    %c0_i32_0 = arith.constant 0 : i32
    return %c0_i32, %arg1 : i32, i32
  }
  func.func @transform_3(%arg0: i32, %arg1: i32, %arg2: i32) -> (i32, i32) {
    %c0_i32 = arith.constant 0 : i32
    return %arg0, %arg1 : i32, i32
  }
  func.func @transform_4(%arg0: i32, %arg1: i32, %arg2: i32) -> (i32, i32) {
    %c0_i32 = arith.constant 0 : i32
    return %arg0, %arg1 : i32, i32
  }
}

module attributes {stable_mosaic.version = 11 : i64} {
  func.func @_ln_matmul_kernel(%arg0: i32, %arg1: i32, %arg2: memref<16x32xbf16, #tpu.memory_space<vmem>>, %arg3: memref<1x32xf32, #tpu.memory_space<vmem>>, %arg4: memref<1x32xf32, #tpu.memory_space<vmem>>, %arg5: memref<32x64xbf16, #tpu.memory_space<vmem>>, %arg6: memref<1x64xf32, #tpu.memory_space<vmem>>, %arg7: memref<16x64xbf16, #tpu.memory_space<vmem>>, %arg8: memref<16x32xbf16, #tpu.memory_space<vmem>>) attributes {dimension_semantics = [#tpu.dimension_semantics<parallel>, #tpu.dimension_semantics<arbitrary>], iteration_bounds = array<i64: 1, 1>, scalar_prefetch = 0 : i64, scratch_operands = 1 : i64, tpu.core_type = #tpu.core_type<tc>, window_params = [{transform_indices = @transform_0, window_bounds = array<i64: 16, 32>}, {pipeline_mode = #tpu.pipeline_mode<synchronous>, transform_indices = @transform_1, window_bounds = array<i64: 1, 32>}, {pipeline_mode = #tpu.pipeline_mode<synchronous>, transform_indices = @transform_2, window_bounds = array<i64: 1, 32>}, {transform_indices = @transform_3, window_bounds = array<i64: 32, 64>}, {transform_indices = @transform_4, window_bounds = array<i64: 1, 64>}, {transform_indices = @transform_5, window_bounds = array<i64: 16, 64>}]} {
    %c0_i32 = arith.constant 0 : i32
    %0 = arith.cmpi eq, %arg1, %c0_i32 : i32
    %1 = arith.extui %0 : i1 to i32
    %c0_i32_0 = arith.constant 0 : i32
    %2 = arith.cmpi ne, %1, %c0_i32_0 : i32
    scf.if %2 {
      %c0_11 = arith.constant 0 : index
      %c0_12 = arith.constant 0 : index
      %19 = vector.load %arg2[%c0_11, %c0_12] : memref<16x32xbf16, #tpu.memory_space<vmem>>, vector<16x32xbf16>
      %20 = arith.extf %19 : vector<16x32xbf16> to vector<16x32xf32>
      %cst_13 = arith.constant dense<0.000000e+00> : vector<16xf32>
      %21 = vector.multi_reduction <add>, %20, %cst_13 [1] : vector<16x32xf32> to vector<16xf32>
      %22 = vector.shape_cast %21 : vector<16xf32> to vector<16x1xf32>
      %cst_14 = arith.constant 3.200000e+01 : f32
      %23 = vector.broadcast %cst_14 : f32 to vector<16x1xf32>
      %24 = arith.divf %22, %23 : vector<16x1xf32>
      %25 = vector.broadcast %24 : vector<16x1xf32> to vector<16x32xf32>
      %26 = arith.subf %20, %25 : vector<16x32xf32>
      %27 = arith.mulf %26, %26 : vector<16x32xf32>
      %cst_15 = arith.constant dense<0.000000e+00> : vector<16xf32>
      %28 = vector.multi_reduction <add>, %27, %cst_15 [1] : vector<16x32xf32> to vector<16xf32>
      %29 = vector.shape_cast %28 : vector<16xf32> to vector<16x1xf32>
      %cst_16 = arith.constant 3.200000e+01 : f32
      %30 = vector.broadcast %cst_16 : f32 to vector<16x1xf32>
      %31 = arith.divf %29, %30 : vector<16x1xf32>
      %cst_17 = arith.constant 9.99999974E-6 : f32
      %32 = vector.broadcast %cst_17 : f32 to vector<16x1xf32>
      %33 = arith.addf %31, %32 : vector<16x1xf32>
      %34 = math.rsqrt %33 : vector<16x1xf32>
      %35 = vector.broadcast %34 : vector<16x1xf32> to vector<16x32xf32>
      %36 = arith.mulf %26, %35 : vector<16x32xf32>
      %c0_18 = arith.constant 0 : index
      %c0_19 = arith.constant 0 : index
      %37 = vector.load %arg3[%c0_18, %c0_19] : memref<1x32xf32, #tpu.memory_space<vmem>>, vector<1x32xf32>
      %38 = vector.broadcast %37 : vector<1x32xf32> to vector<16x32xf32>
      %39 = arith.mulf %36, %38 : vector<16x32xf32>
      %c0_20 = arith.constant 0 : index
      %c0_21 = arith.constant 0 : index
      %40 = vector.load %arg4[%c0_20, %c0_21] : memref<1x32xf32, #tpu.memory_space<vmem>>, vector<1x32xf32>
      %41 = vector.broadcast %40 : vector<1x32xf32> to vector<16x32xf32>
      %42 = arith.addf %39, %41 : vector<16x32xf32>
      %43 = arith.truncf %42 : vector<16x32xf32> to vector<16x32xbf16>
      %c0_22 = arith.constant 0 : index
      %c0_23 = arith.constant 0 : index
      %44 = vector.load %arg8[%c0_22, %c0_23] : memref<16x32xbf16, #tpu.memory_space<vmem>>, vector<16x32xbf16>
      tpu.vector_store %arg8[%c0_22, %c0_23], %43 {strides = array<i32>} : memref<16x32xbf16, #tpu.memory_space<vmem>>, vector<16x32xbf16>,
    } else {
    }
    %c0 = arith.constant 0 : index
    %c0_1 = arith.constant 0 : index
    %3 = vector.load %arg8[%c0, %c0_1] : memref<16x32xbf16, #tpu.memory_space<vmem>>, vector<16x32xbf16>
    %c0_2 = arith.constant 0 : index
    %c0_3 = arith.constant 0 : index
    %4 = vector.load %arg5[%c0_2, %c0_3] : memref<32x64xbf16, #tpu.memory_space<vmem>>, vector<32x64xbf16>
    %cst = arith.constant dense<0.000000e+00> : vector<16x64xf32>
    %5 = tpu.matmul %3, %4, %cst {dimension_numbers = #tpu.dot_dimension_numbers<[1], [0], [0], [1], [0, 0, 1, 1], [], []>} : vector<16x32xbf16>, vector<32x64xbf16>, vector<16x64xf32> -> vector<16x64xf32>
    %c0_4 = arith.constant 0 : index
    %c0_5 = arith.constant 0 : index
    %6 = vector.load %arg6[%c0_4, %c0_5] : memref<1x64xf32, #tpu.memory_space<vmem>>, vector<1x64xf32>
    %7 = vector.broadcast %6 : vector<1x64xf32> to vector<16x64xf32>
    %8 = arith.addf %5, %7 : vector<16x64xf32>
    %cst_6 = arith.constant 5.000000e-01 : f32
    %9 = vector.broadcast %cst_6 : f32 to vector<16x64xf32>
    %10 = arith.mulf %9, %8 : vector<16x64xf32>
    %cst_7 = arith.constant 0.707106769 : f32
    %11 = vector.broadcast %cst_7 : f32 to vector<16x64xf32>
    %12 = arith.mulf %8, %11 : vector<16x64xf32>
    %13 = math.erf %12 : vector<16x64xf32>
    %cst_8 = arith.constant 1.000000e+00 : f32
    %14 = vector.broadcast %cst_8 : f32 to vector<16x64xf32>
    %15 = arith.addf %14, %13 : vector<16x64xf32>
    %16 = arith.mulf %10, %15 : vector<16x64xf32>
    %17 = arith.truncf %16 : vector<16x64xf32> to vector<16x64xbf16>
    %c0_9 = arith.constant 0 : index
    %c0_10 = arith.constant 0 : index
    %18 = vector.load %arg7[%c0_9, %c0_10] : memref<16x64xbf16, #tpu.memory_space<vmem>>, vector<16x64xbf16>
    tpu.vector_store %arg7[%c0_9, %c0_10], %17 {strides = array<i32>} : memref<16x64xbf16, #tpu.memory_space<vmem>>, vector<16x64xbf16>,
    return
  }
  func.func @transform_0(%arg0: i32, %arg1: i32) -> (i32, i32) {
    %c0_i32 = arith.constant 0 : i32
    %c0_i32_0 = arith.constant 0 : i32
    return %arg0, %c0_i32 : i32, i32
  }
  func.func @transform_1(%arg0: i32, %arg1: i32) -> (i32, i32) {
    %c0_i32 = arith.constant 0 : i32
    %c0_i32_0 = arith.constant 0 : i32
    %c0_i32_1 = arith.constant 0 : i32
    return %c0_i32, %c0_i32_0 : i32, i32
  }
  func.func @transform_2(%arg0: i32, %arg1: i32) -> (i32, i32) {
    %c0_i32 = arith.constant 0 : i32
    %c0_i32_0 = arith.constant 0 : i32
    %c0_i32_1 = arith.constant 0 : i32
    return %c0_i32, %c0_i32_0 : i32, i32
  }
  func.func @transform_3(%arg0: i32, %arg1: i32) -> (i32, i32) {
    %c0_i32 = arith.constant 0 : i32
    %c0_i32_0 = arith.constant 0 : i32
    return %c0_i32, %arg1 : i32, i32
  }
  func.func @transform_4(%arg0: i32, %arg1: i32) -> (i32, i32) {
    %c0_i32 = arith.constant 0 : i32
    %c0_i32_0 = arith.constant 0 : i32
    return %c0_i32, %arg1 : i32, i32
  }
  func.func @transform_5(%arg0: i32, %arg1: i32) -> (i32, i32) {
    %c0_i32 = arith.constant 0 : i32
    return %arg0, %arg1 : i32, i32
  }
}

module attributes {stable_mosaic.version = 11 : i64} {
  func.func @_flash_attn_kernel(%arg0: i32, %arg1: i32, %arg2: i32, %arg3: memref<1x8x8xbf16, #tpu.memory_space<vmem>>, %arg4: memref<1x8x8xbf16, #tpu.memory_space<vmem>>, %arg5: memref<1x8x8xbf16, #tpu.memory_space<vmem>>, %arg6: memref<1x8x8xbf16, #tpu.memory_space<vmem>>, %arg7: memref<8x1xf32, #tpu.memory_space<vmem>>, %arg8: memref<8x1xf32, #tpu.memory_space<vmem>>, %arg9: memref<8x8xf32, #tpu.memory_space<vmem>>) attributes {dimension_semantics = [#tpu.dimension_semantics<parallel>, #tpu.dimension_semantics<parallel>, #tpu.dimension_semantics<arbitrary>], iteration_bounds = array<i64: 8, 1, 1>, scalar_prefetch = 0 : i64, scratch_operands = 3 : i64, tpu.core_type = #tpu.core_type<tc>, window_params = [{transform_indices = @transform_0, window_bounds = array<i64: 1, 8, 8>}, {transform_indices = @transform_1, window_bounds = array<i64: 1, 8, 8>}, {transform_indices = @transform_2, window_bounds = array<i64: 1, 8, 8>}, {transform_indices = @transform_3, window_bounds = array<i64: 1, 8, 8>}]} {
    %c0_i32 = arith.constant 0 : i32
    %0 = arith.cmpi eq, %arg2, %c0_i32 : i32
    %1 = arith.extui %0 : i1 to i32
    %c0_i32_0 = arith.constant 0 : i32
    %2 = arith.cmpi ne, %1, %c0_i32_0 : i32
    scf.if %2 {
      %cst = arith.constant -1.000000e+30 : f32
      %12 = vector.broadcast %cst : f32 to vector<8x1xf32>
      %c0 = arith.constant 0 : index
      %c0_6 = arith.constant 0 : index
      %13 = vector.load %arg7[%c0, %c0_6] : memref<8x1xf32, #tpu.memory_space<vmem>>, vector<8x1xf32>
      tpu.vector_store %arg7[%c0, %c0_6], %12 {strides = array<i32>} : memref<8x1xf32, #tpu.memory_space<vmem>>, vector<8x1xf32>,
      %cst_7 = arith.constant 0.000000e+00 : f32
      %14 = vector.broadcast %cst_7 : f32 to vector<8x1xf32>
      %c0_8 = arith.constant 0 : index
      %c0_9 = arith.constant 0 : index
      %15 = vector.load %arg8[%c0_8, %c0_9] : memref<8x1xf32, #tpu.memory_space<vmem>>, vector<8x1xf32>
      tpu.vector_store %arg8[%c0_8, %c0_9], %14 {strides = array<i32>} : memref<8x1xf32, #tpu.memory_space<vmem>>, vector<8x1xf32>,
      %cst_10 = arith.constant 0.000000e+00 : f32
      %16 = vector.broadcast %cst_10 : f32 to vector<8x8xf32>
      %c0_11 = arith.constant 0 : index
      %c0_12 = arith.constant 0 : index
      %17 = vector.load %arg9[%c0_11, %c0_12] : memref<8x8xf32, #tpu.memory_space<vmem>>, vector<8x8xf32>
      tpu.vector_store %arg9[%c0_11, %c0_12], %16 {strides = array<i32>} : memref<8x8xf32, #tpu.memory_space<vmem>>, vector<8x8xf32>,
    } else {
    }
    %c8_i32 = arith.constant 8 : i32
    %3 = arith.muli %arg1, %c8_i32 : i32
    %c8_i32_1 = arith.constant 8 : i32
    %4 = arith.muli %arg2, %c8_i32_1 : i32
    %c8_i32_2 = arith.constant 8 : i32
    %5 = arith.addi %3, %c8_i32_2 : i32
    %6 = arith.cmpi slt, %4, %5 : i32
    %7 = arith.extui %6 : i1 to i32
    %c0_i32_3 = arith.constant 0 : i32
    %8 = arith.cmpi ne, %7, %c0_i32_3 : i32
    scf.if %8 {
      %c0 = arith.constant 0 : index
      %c0_6 = arith.constant 0 : index
      %c0_7 = arith.constant 0 : index
      %12 = vector.load %arg3[%c0, %c0_6, %c0_7] : memref<1x8x8xbf16, #tpu.memory_space<vmem>>, vector<1x8x8xbf16>
      %13 = vector.shape_cast %12 : vector<1x8x8xbf16> to vector<8x8xbf16>
      %c0_8 = arith.constant 0 : index
      %c0_9 = arith.constant 0 : index
      %c0_10 = arith.constant 0 : index
      %14 = vector.load %arg4[%c0_8, %c0_9, %c0_10] : memref<1x8x8xbf16, #tpu.memory_space<vmem>>, vector<1x8x8xbf16>
      %15 = vector.shape_cast %14 : vector<1x8x8xbf16> to vector<8x8xbf16>
      %cst = arith.constant dense<0.000000e+00> : vector<8x8xf32>
      %16 = tpu.matmul %13, %15, %cst {dimension_numbers = #tpu.dot_dimension_numbers<[1], [1], [0], [0], [0, 0, 1, 0], [], []>} : vector<8x8xbf16>, vector<8x8xbf16>, vector<8x8xf32> -> vector<8x8xf32>
      %cst_11 = arith.constant 0.353553385 : f32
      %17 = vector.broadcast %cst_11 : f32 to vector<8x8xf32>
      %18 = arith.mulf %16, %17 : vector<8x8xf32>
      %19 = tpu.iota {dimensions = array<i32: 0>} : vector<8x8xi32>
      %20 = vector.broadcast %3 : i32 to vector<8x8xi32>
      %21 = arith.addi %20, %19 : vector<8x8xi32>
      %22 = tpu.iota {dimensions = array<i32: 1>} : vector<8x8xi32>
      %23 = vector.broadcast %4 : i32 to vector<8x8xi32>
      %24 = arith.addi %23, %22 : vector<8x8xi32>
      %25 = arith.cmpi sgt, %24, %21 : vector<8x8xi32>
      %cst_12 = arith.constant -1.000000e+30 : f32
      %26 = vector.broadcast %cst_12 : f32 to vector<8x8xf32>
      %27 = arith.select %25, %26, %18 : vector<8x8xi1>, vector<8x8xf32>
      %c0_13 = arith.constant 0 : index
      %c0_14 = arith.constant 0 : index
      %28 = vector.load %arg7[%c0_13, %c0_14] : memref<8x1xf32, #tpu.memory_space<vmem>>, vector<8x1xf32>
      %cst_15 = arith.constant dense<0xFF800000> : vector<8xf32>
      %29 = vector.multi_reduction <maximumf>, %27, %cst_15 [1] : vector<8x8xf32> to vector<8xf32>
      %30 = vector.shape_cast %29 : vector<8xf32> to vector<8x1xf32>
      %31 = arith.maximumf %28, %30 : vector<8x1xf32>
      %32 = arith.subf %28, %31 : vector<8x1xf32>
      %33 = math.exp %32 : vector<8x1xf32>
      %34 = vector.broadcast %31 : vector<8x1xf32> to vector<8x8xf32>
      %35 = arith.subf %27, %34 : vector<8x8xf32>
      %36 = math.exp %35 : vector<8x8xf32>
      %c0_16 = arith.constant 0 : index
      %c0_17 = arith.constant 0 : index
      %37 = vector.load %arg8[%c0_16, %c0_17] : memref<8x1xf32, #tpu.memory_space<vmem>>, vector<8x1xf32>
      %38 = arith.mulf %33, %37 : vector<8x1xf32>
      %cst_18 = arith.constant dense<0.000000e+00> : vector<8xf32>
      %39 = vector.multi_reduction <add>, %36, %cst_18 [1] : vector<8x8xf32> to vector<8xf32>
      %40 = vector.shape_cast %39 : vector<8xf32> to vector<8x1xf32>
      %41 = arith.addf %38, %40 : vector<8x1xf32>
      %c0_19 = arith.constant 0 : index
      %c0_20 = arith.constant 0 : index
      %42 = vector.load %arg8[%c0_19, %c0_20] : memref<8x1xf32, #tpu.memory_space<vmem>>, vector<8x1xf32>
      tpu.vector_store %arg8[%c0_19, %c0_20], %41 {strides = array<i32>} : memref<8x1xf32, #tpu.memory_space<vmem>>, vector<8x1xf32>,
      %c0_21 = arith.constant 0 : index
      %c0_22 = arith.constant 0 : index
      %43 = vector.load %arg9[%c0_21, %c0_22] : memref<8x8xf32, #tpu.memory_space<vmem>>, vector<8x8xf32>
      %44 = vector.broadcast %33 : vector<8x1xf32> to vector<8x8xf32>
      %45 = arith.mulf %44, %43 : vector<8x8xf32>
      %46 = arith.truncf %36 : vector<8x8xf32> to vector<8x8xbf16>
      %c0_23 = arith.constant 0 : index
      %c0_24 = arith.constant 0 : index
      %c0_25 = arith.constant 0 : index
      %47 = vector.load %arg5[%c0_23, %c0_24, %c0_25] : memref<1x8x8xbf16, #tpu.memory_space<vmem>>, vector<1x8x8xbf16>
      %48 = vector.shape_cast %47 : vector<1x8x8xbf16> to vector<8x8xbf16>
      %cst_26 = arith.constant dense<0.000000e+00> : vector<8x8xf32>
      %49 = tpu.matmul %46, %48, %cst_26 {dimension_numbers = #tpu.dot_dimension_numbers<[1], [0], [0], [1], [0, 0, 1, 1], [], []>} : vector<8x8xbf16>, vector<8x8xbf16>, vector<8x8xf32> -> vector<8x8xf32>
      %50 = arith.addf %45, %49 : vector<8x8xf32>
      %c0_27 = arith.constant 0 : index
      %c0_28 = arith.constant 0 : index
      %51 = vector.load %arg9[%c0_27, %c0_28] : memref<8x8xf32, #tpu.memory_space<vmem>>, vector<8x8xf32>
      tpu.vector_store %arg9[%c0_27, %c0_28], %50 {strides = array<i32>} : memref<8x8xf32, #tpu.memory_space<vmem>>, vector<8x8xf32>,
      %c0_29 = arith.constant 0 : index
      %c0_30 = arith.constant 0 : index
      %52 = vector.load %arg7[%c0_29, %c0_30] : memref<8x1xf32, #tpu.memory_space<vmem>>, vector<8x1xf32>
      tpu.vector_store %arg7[%c0_29, %c0_30], %31 {strides = array<i32>} : memref<8x1xf32, #tpu.memory_space<vmem>>, vector<8x1xf32>,
    } else {
    }
    %c0_i32_4 = arith.constant 0 : i32
    %9 = arith.cmpi eq, %arg2, %c0_i32_4 : i32
    %10 = arith.extui %9 : i1 to i32
    %c0_i32_5 = arith.constant 0 : i32
    %11 = arith.cmpi ne, %10, %c0_i32_5 : i32
    scf.if %11 {
      %c0 = arith.constant 0 : index
      %c0_6 = arith.constant 0 : index
      %12 = vector.load %arg9[%c0, %c0_6] : memref<8x8xf32, #tpu.memory_space<vmem>>, vector<8x8xf32>
      %c0_7 = arith.constant 0 : index
      %c0_8 = arith.constant 0 : index
      %13 = vector.load %arg8[%c0_7, %c0_8] : memref<8x1xf32, #tpu.memory_space<vmem>>, vector<8x1xf32>
      %14 = tpu.reciprocal %13 {approx = true} : vector<8x1xf32> -> vector<8x1xf32>
      %15 = vector.broadcast %14 : vector<8x1xf32> to vector<8x8xf32>
      %16 = arith.mulf %12, %15 : vector<8x8xf32>
      %17 = arith.truncf %16 : vector<8x8xf32> to vector<8x8xbf16>
      %c0_9 = arith.constant 0 : index
      %c0_10 = arith.constant 0 : index
      %c0_11 = arith.constant 0 : index
      %18 = vector.load %arg6[%c0_9, %c0_10, %c0_11] : memref<1x8x8xbf16, #tpu.memory_space<vmem>>, vector<1x8x8xbf16>
      %19 = vector.shape_cast %18 : vector<1x8x8xbf16> to vector<8x8xbf16>
      %20 = vector.shape_cast %17 : vector<8x8xbf16> to vector<1x8x8xbf16>
      tpu.vector_store %arg6[%c0_9, %c0_10, %c0_11], %20 {strides = array<i32>} : memref<1x8x8xbf16, #tpu.memory_space<vmem>>, vector<1x8x8xbf16>,
    } else {
    }
    return
  }
  func.func @transform_0(%arg0: i32, %arg1: i32, %arg2: i32) -> (i32, i32, i32) {
    %c0_i32 = arith.constant 0 : i32
    %c0_i32_0 = arith.constant 0 : i32
    return %arg0, %arg1, %c0_i32 : i32, i32, i32
  }
  func.func @transform_1(%arg0: i32, %arg1: i32, %arg2: i32) -> (i32, i32, i32) {
    %0 = arith.minsi %arg2, %arg1 : i32
    %c0_i32 = arith.constant 0 : i32
    %c0_i32_0 = arith.constant 0 : i32
    return %arg0, %0, %c0_i32 : i32, i32, i32
  }
  func.func @transform_2(%arg0: i32, %arg1: i32, %arg2: i32) -> (i32, i32, i32) {
    %0 = arith.minsi %arg2, %arg1 : i32
    %c0_i32 = arith.constant 0 : i32
    %c0_i32_0 = arith.constant 0 : i32
    return %arg0, %0, %c0_i32 : i32, i32, i32
  }
  func.func @transform_3(%arg0: i32, %arg1: i32, %arg2: i32) -> (i32, i32, i32) {
    %c0_i32 = arith.constant 0 : i32
    %c0_i32_0 = arith.constant 0 : i32
    return %arg0, %arg1, %c0_i32 : i32, i32, i32
  }
}

module attributes {stable_mosaic.version = 11 : i64} {
  func.func @_matmul_kernel(%arg0: i32, %arg1: i32, %arg2: i32, %arg3: memref<16x64xbf16, #tpu.memory_space<vmem>>, %arg4: memref<64x32xbf16, #tpu.memory_space<vmem>>, %arg5: memref<1x32xf32, #tpu.memory_space<vmem>>, %arg6: memref<16x32xbf16, #tpu.memory_space<vmem>>, %arg7: memref<16x32xbf16, #tpu.memory_space<vmem>>, %arg8: memref<16x32xf32, #tpu.memory_space<vmem>>) attributes {dimension_semantics = [#tpu.dimension_semantics<parallel>, #tpu.dimension_semantics<parallel>, #tpu.dimension_semantics<arbitrary>], iteration_bounds = array<i64: 1, 1, 1>, scalar_prefetch = 0 : i64, scratch_operands = 1 : i64, tpu.core_type = #tpu.core_type<tc>, window_params = [{transform_indices = @transform_0, window_bounds = array<i64: 16, 64>}, {transform_indices = @transform_1, window_bounds = array<i64: 64, 32>}, {transform_indices = @transform_2, window_bounds = array<i64: 1, 32>}, {transform_indices = @transform_3, window_bounds = array<i64: 16, 32>}, {transform_indices = @transform_4, window_bounds = array<i64: 16, 32>}]} {
    %c0_i32 = arith.constant 0 : i32
    %0 = arith.cmpi eq, %arg2, %c0_i32 : i32
    %1 = arith.extui %0 : i1 to i32
    %c0_i32_0 = arith.constant 0 : i32
    %2 = arith.cmpi ne, %1, %c0_i32_0 : i32
    scf.if %2 {
      %cst_10 = arith.constant 0.000000e+00 : f32
      %12 = vector.broadcast %cst_10 : f32 to vector<16x32xf32>
      %c0_11 = arith.constant 0 : index
      %c0_12 = arith.constant 0 : index
      %13 = vector.load %arg8[%c0_11, %c0_12] : memref<16x32xf32, #tpu.memory_space<vmem>>, vector<16x32xf32>
      tpu.vector_store %arg8[%c0_11, %c0_12], %12 {strides = array<i32>} : memref<16x32xf32, #tpu.memory_space<vmem>>, vector<16x32xf32>,
    } else {
    }
    %c0 = arith.constant 0 : index
    %c0_1 = arith.constant 0 : index
    %3 = vector.load %arg8[%c0, %c0_1] : memref<16x32xf32, #tpu.memory_space<vmem>>, vector<16x32xf32>
    %c0_2 = arith.constant 0 : index
    %c0_3 = arith.constant 0 : index
    %4 = vector.load %arg3[%c0_2, %c0_3] : memref<16x64xbf16, #tpu.memory_space<vmem>>, vector<16x64xbf16>
    %c0_4 = arith.constant 0 : index
    %c0_5 = arith.constant 0 : index
    %5 = vector.load %arg4[%c0_4, %c0_5] : memref<64x32xbf16, #tpu.memory_space<vmem>>, vector<64x32xbf16>
    %cst = arith.constant dense<0.000000e+00> : vector<16x32xf32>
    %6 = tpu.matmul %4, %5, %cst {dimension_numbers = #tpu.dot_dimension_numbers<[1], [0], [0], [1], [0, 0, 1, 1], [], []>} : vector<16x64xbf16>, vector<64x32xbf16>, vector<16x32xf32> -> vector<16x32xf32>
    %7 = arith.addf %3, %6 : vector<16x32xf32>
    %c0_6 = arith.constant 0 : index
    %c0_7 = arith.constant 0 : index
    %8 = vector.load %arg8[%c0_6, %c0_7] : memref<16x32xf32, #tpu.memory_space<vmem>>, vector<16x32xf32>
    tpu.vector_store %arg8[%c0_6, %c0_7], %7 {strides = array<i32>} : memref<16x32xf32, #tpu.memory_space<vmem>>, vector<16x32xf32>,
    %c0_i32_8 = arith.constant 0 : i32
    %9 = arith.cmpi eq, %arg2, %c0_i32_8 : i32
    %10 = arith.extui %9 : i1 to i32
    %c0_i32_9 = arith.constant 0 : i32
    %11 = arith.cmpi ne, %10, %c0_i32_9 : i32
    scf.if %11 {
      %c0_10 = arith.constant 0 : index
      %c0_11 = arith.constant 0 : index
      %12 = vector.load %arg8[%c0_10, %c0_11] : memref<16x32xf32, #tpu.memory_space<vmem>>, vector<16x32xf32>
      %c0_12 = arith.constant 0 : index
      %c0_13 = arith.constant 0 : index
      %13 = vector.load %arg5[%c0_12, %c0_13] : memref<1x32xf32, #tpu.memory_space<vmem>>, vector<1x32xf32>
      %14 = vector.broadcast %13 : vector<1x32xf32> to vector<16x32xf32>
      %15 = arith.addf %12, %14 : vector<16x32xf32>
      %c0_14 = arith.constant 0 : index
      %c0_15 = arith.constant 0 : index
      %16 = vector.load %arg6[%c0_14, %c0_15] : memref<16x32xbf16, #tpu.memory_space<vmem>>, vector<16x32xbf16>
      %17 = arith.extf %16 : vector<16x32xbf16> to vector<16x32xf32>
      %18 = arith.addf %15, %17 : vector<16x32xf32>
      %19 = arith.truncf %18 : vector<16x32xf32> to vector<16x32xbf16>
      %c0_16 = arith.constant 0 : index
      %c0_17 = arith.constant 0 : index
      %20 = vector.load %arg7[%c0_16, %c0_17] : memref<16x32xbf16, #tpu.memory_space<vmem>>, vector<16x32xbf16>
      tpu.vector_store %arg7[%c0_16, %c0_17], %19 {strides = array<i32>} : memref<16x32xbf16, #tpu.memory_space<vmem>>, vector<16x32xbf16>,
    } else {
    }
    return
  }
  func.func @transform_0(%arg0: i32, %arg1: i32, %arg2: i32) -> (i32, i32) {
    %c0_i32 = arith.constant 0 : i32
    return %arg0, %arg2 : i32, i32
  }
  func.func @transform_1(%arg0: i32, %arg1: i32, %arg2: i32) -> (i32, i32) {
    %c0_i32 = arith.constant 0 : i32
    return %arg2, %arg1 : i32, i32
  }
  func.func @transform_2(%arg0: i32, %arg1: i32, %arg2: i32) -> (i32, i32) {
    %c0_i32 = arith.constant 0 : i32
    %c0_i32_0 = arith.constant 0 : i32
    return %c0_i32, %arg1 : i32, i32
  }
  func.func @transform_3(%arg0: i32, %arg1: i32, %arg2: i32) -> (i32, i32) {
    %c0_i32 = arith.constant 0 : i32
    return %arg0, %arg1 : i32, i32
  }
  func.func @transform_4(%arg0: i32, %arg1: i32, %arg2: i32) -> (i32, i32) {
    %c0_i32 = arith.constant 0 : i32
    return %arg0, %arg1 : i32, i32
  }
}

module attributes {stable_mosaic.version = 11 : i64} {
  func.func @_ln_matmul_kernel(%arg0: i32, %arg1: i32, %arg2: memref<16x32xbf16, #tpu.memory_space<vmem>>, %arg3: memref<1x32xf32, #tpu.memory_space<vmem>>, %arg4: memref<1x32xf32, #tpu.memory_space<vmem>>, %arg5: memref<32x128xbf16, #tpu.memory_space<vmem>>, %arg6: memref<1x128xf32, #tpu.memory_space<vmem>>, %arg7: memref<16x128xf32, #tpu.memory_space<vmem>>, %arg8: memref<16x32xbf16, #tpu.memory_space<vmem>>) attributes {dimension_semantics = [#tpu.dimension_semantics<parallel>, #tpu.dimension_semantics<arbitrary>], iteration_bounds = array<i64: 1, 1>, scalar_prefetch = 0 : i64, scratch_operands = 1 : i64, tpu.core_type = #tpu.core_type<tc>, window_params = [{transform_indices = @transform_0, window_bounds = array<i64: 16, 32>}, {pipeline_mode = #tpu.pipeline_mode<synchronous>, transform_indices = @transform_1, window_bounds = array<i64: 1, 32>}, {pipeline_mode = #tpu.pipeline_mode<synchronous>, transform_indices = @transform_2, window_bounds = array<i64: 1, 32>}, {transform_indices = @transform_3, window_bounds = array<i64: 32, 128>}, {transform_indices = @transform_4, window_bounds = array<i64: 1, 128>}, {transform_indices = @transform_5, window_bounds = array<i64: 16, 128>}]} {
    %c0_i32 = arith.constant 0 : i32
    %0 = arith.cmpi eq, %arg1, %c0_i32 : i32
    %1 = arith.extui %0 : i1 to i32
    %c0_i32_0 = arith.constant 0 : i32
    %2 = arith.cmpi ne, %1, %c0_i32_0 : i32
    scf.if %2 {
      %c0_8 = arith.constant 0 : index
      %c0_9 = arith.constant 0 : index
      %10 = vector.load %arg2[%c0_8, %c0_9] : memref<16x32xbf16, #tpu.memory_space<vmem>>, vector<16x32xbf16>
      %11 = arith.extf %10 : vector<16x32xbf16> to vector<16x32xf32>
      %cst_10 = arith.constant dense<0.000000e+00> : vector<16xf32>
      %12 = vector.multi_reduction <add>, %11, %cst_10 [1] : vector<16x32xf32> to vector<16xf32>
      %13 = vector.shape_cast %12 : vector<16xf32> to vector<16x1xf32>
      %cst_11 = arith.constant 3.200000e+01 : f32
      %14 = vector.broadcast %cst_11 : f32 to vector<16x1xf32>
      %15 = arith.divf %13, %14 : vector<16x1xf32>
      %16 = vector.broadcast %15 : vector<16x1xf32> to vector<16x32xf32>
      %17 = arith.subf %11, %16 : vector<16x32xf32>
      %18 = arith.mulf %17, %17 : vector<16x32xf32>
      %cst_12 = arith.constant dense<0.000000e+00> : vector<16xf32>
      %19 = vector.multi_reduction <add>, %18, %cst_12 [1] : vector<16x32xf32> to vector<16xf32>
      %20 = vector.shape_cast %19 : vector<16xf32> to vector<16x1xf32>
      %cst_13 = arith.constant 3.200000e+01 : f32
      %21 = vector.broadcast %cst_13 : f32 to vector<16x1xf32>
      %22 = arith.divf %20, %21 : vector<16x1xf32>
      %cst_14 = arith.constant 9.99999974E-6 : f32
      %23 = vector.broadcast %cst_14 : f32 to vector<16x1xf32>
      %24 = arith.addf %22, %23 : vector<16x1xf32>
      %25 = math.rsqrt %24 : vector<16x1xf32>
      %26 = vector.broadcast %25 : vector<16x1xf32> to vector<16x32xf32>
      %27 = arith.mulf %17, %26 : vector<16x32xf32>
      %c0_15 = arith.constant 0 : index
      %c0_16 = arith.constant 0 : index
      %28 = vector.load %arg3[%c0_15, %c0_16] : memref<1x32xf32, #tpu.memory_space<vmem>>, vector<1x32xf32>
      %29 = vector.broadcast %28 : vector<1x32xf32> to vector<16x32xf32>
      %30 = arith.mulf %27, %29 : vector<16x32xf32>
      %c0_17 = arith.constant 0 : index
      %c0_18 = arith.constant 0 : index
      %31 = vector.load %arg4[%c0_17, %c0_18] : memref<1x32xf32, #tpu.memory_space<vmem>>, vector<1x32xf32>
      %32 = vector.broadcast %31 : vector<1x32xf32> to vector<16x32xf32>
      %33 = arith.addf %30, %32 : vector<16x32xf32>
      %34 = arith.truncf %33 : vector<16x32xf32> to vector<16x32xbf16>
      %c0_19 = arith.constant 0 : index
      %c0_20 = arith.constant 0 : index
      %35 = vector.load %arg8[%c0_19, %c0_20] : memref<16x32xbf16, #tpu.memory_space<vmem>>, vector<16x32xbf16>
      tpu.vector_store %arg8[%c0_19, %c0_20], %34 {strides = array<i32>} : memref<16x32xbf16, #tpu.memory_space<vmem>>, vector<16x32xbf16>,
    } else {
    }
    %c0 = arith.constant 0 : index
    %c0_1 = arith.constant 0 : index
    %3 = vector.load %arg8[%c0, %c0_1] : memref<16x32xbf16, #tpu.memory_space<vmem>>, vector<16x32xbf16>
    %c0_2 = arith.constant 0 : index
    %c0_3 = arith.constant 0 : index
    %4 = vector.load %arg5[%c0_2, %c0_3] : memref<32x128xbf16, #tpu.memory_space<vmem>>, vector<32x128xbf16>
    %cst = arith.constant dense<0.000000e+00> : vector<16x128xf32>
    %5 = tpu.matmul %3, %4, %cst {dimension_numbers = #tpu.dot_dimension_numbers<[1], [0], [0], [1], [0, 0, 1, 1], [], []>} : vector<16x32xbf16>, vector<32x128xbf16>, vector<16x128xf32> -> vector<16x128xf32>
    %c0_4 = arith.constant 0 : index
    %c0_5 = arith.constant 0 : index
    %6 = vector.load %arg6[%c0_4, %c0_5] : memref<1x128xf32, #tpu.memory_space<vmem>>, vector<1x128xf32>
    %7 = vector.broadcast %6 : vector<1x128xf32> to vector<16x128xf32>
    %8 = arith.addf %5, %7 : vector<16x128xf32>
    %c0_6 = arith.constant 0 : index
    %c0_7 = arith.constant 0 : index
    %9 = vector.load %arg7[%c0_6, %c0_7] : memref<16x128xf32, #tpu.memory_space<vmem>>, vector<16x128xf32>
    tpu.vector_store %arg7[%c0_6, %c0_7], %8 {strides = array<i32>} : memref<16x128xf32, #tpu.memory_space<vmem>>, vector<16x128xf32>,
    return
  }
  func.func @transform_0(%arg0: i32, %arg1: i32) -> (i32, i32) {
    %c0_i32 = arith.constant 0 : i32
    %c0_i32_0 = arith.constant 0 : i32
    return %arg0, %c0_i32 : i32, i32
  }
  func.func @transform_1(%arg0: i32, %arg1: i32) -> (i32, i32) {
    %c0_i32 = arith.constant 0 : i32
    %c0_i32_0 = arith.constant 0 : i32
    %c0_i32_1 = arith.constant 0 : i32
    return %c0_i32, %c0_i32_0 : i32, i32
  }
  func.func @transform_2(%arg0: i32, %arg1: i32) -> (i32, i32) {
    %c0_i32 = arith.constant 0 : i32
    %c0_i32_0 = arith.constant 0 : i32
    %c0_i32_1 = arith.constant 0 : i32
    return %c0_i32, %c0_i32_0 : i32, i32
  }
  func.func @transform_3(%arg0: i32, %arg1: i32) -> (i32, i32) {
    %c0_i32 = arith.constant 0 : i32
    %c0_i32_0 = arith.constant 0 : i32
    return %c0_i32, %arg1 : i32, i32
  }
  func.func @transform_4(%arg0: i32, %arg1: i32) -> (i32, i32) {
    %c0_i32 = arith.constant 0 : i32
    %c0_i32_0 = arith.constant 0 : i32
    return %c0_i32, %arg1 : i32, i32
  }
  func.func @transform_5(%arg0: i32, %arg1: i32) -> (i32, i32) {
    %c0_i32 = arith.constant 0 : i32
    return %arg0, %arg1 : i32, i32
  }
}

</mosaic_0001>

<llo_original>
// kernel: forward.12
$region0: #{forward.12}
  #allocation0 [shape = 'u32[]', space=smem, size = 0x4, offset = 0x4, fixed_abs, tag = 'smem constant byte address 0x4 - core index']
  #allocation1 [shape = 'u32[144,128]{1,0:T(1,128)}', space=vmem, size = 0x12000, scoped, tag = 'internal scratch']
  #allocation2 [shape = 'f32[8,1]{1,0:T(8,128)}', space=vmem, size = 0x1000, scoped, tag = 'scratch operand']
  #allocation3 [shape = 'f32[8,1]{1,0:T(8,128)}', space=vmem, size = 0x1000, scoped, tag = 'scratch operand']
  #allocation4 [shape = 'f32[8,8]{1,0:T(8,128)}', space=vmem, size = 0x1000, scoped, tag = 'scratch operand']
  %s0 = inlined_call_operand.vmem [shape: bf16[8,8,8], index: 0, kind: input, shape index: {}]
  %s1 = inlined_call_operand.vmem [shape: bf16[8,8,8], index: 1, kind: input, shape index: {}]
  %s2 = inlined_call_operand.vmem [shape: bf16[8,8,8], index: 2, kind: input, shape index: {}]
  %s3 = inlined_call_operand.vmem [shape: bf16[8,8,8], index: 3, kind: output, shape index: {}]
  %s4 = sld [smem:[#allocation0]]
  $region57: #{forward.12} parent=0
    _
  %s6 = ssub.s32 1, %s4
  %s7 = scalar_select 0, %s6, %s4
  loop: start=0, step=1, limit=10
  $region2: #{forward.12} parent=0 // loop_pre_header
    _
  $region3: #{forward.12} parent=0 // loop_header
    %s9 = sphi 0, %s13
    %p10 = scmp.ge.s32.totalorder %s9, 10
    %s16 = sphi 0, %s35
    %s17 = sphi 0, %s31
    %s18 = sphi 0, %s27
    %s19 = sphi 0, %s16
    %s20 = sphi 0, %s17
    %s21 = sphi 0, %s18
    %s22 = sphi 0, %s19
    %s23 = sphi 0, %s20
    %s24 = sphi 0, %s21
    %s40 = sphi 0, %s42
    %s43 = sphi 0, %s40
    %s44 = sphi 0, %s43
    %s60 = sphi 0, %s44
    %s72 = sphi 0, %s74
    %s75 = sphi 0, %s72
    %s76 = sphi 0, %s75
    %s92 = sphi 0, %s76
    %s104 = sphi 0, %s106
    %s107 = sphi 0, %s104
    %s108 = sphi 0, %s107
    %s124 = sphi 0, %s108
    %s132 = sphi 0, %s134
    %s135 = sphi 0, %s132
    %s136 = sphi 0, %s135
    %s152 = sphi 0, %s136
  $region4: #{forward.12} parent=0 // loop_header_branch
    %12 = sbr.rel (%p10) target = $region8
  $region5: #{forward.12} parent=0 // loop_body
    %s14 = ssub.s32 %s9, 1
    %s15 = ssub.s32 %s9, 2
    %s25 = sadd.s32 1, %s18
    %p26 = scmp.ge.s32.totalorder %s25, 1
    %s27 = scalar_select %p26, 0, %s25
    %s28 = sadd.s32 1, %s17
    %s29 = scalar_select %p26, %s28, %s17
    %p30 = scmp.ge.s32.totalorder %s29, 1
    %s31 = scalar_select %p30, 0, %s29
    %s32 = sadd.s32 1, %s16
    %s33 = scalar_select %p30, %s32, %s16
    %p34 = scmp.ge.s32.totalorder %s33, 8
    %s35 = scalar_select %p34, 0, %s33
    %s36 = ssub.s32 %s16, %s35
    %s37 = ssub.s32 %s17, %s31
    %s38 = sor.u32 %s36, %s37
    %p39 = scmp.eq.s32.totalorder %s38, 0
    %s41 = sadd.s32 %s40, 1
    %s42 = scalar_select %p39, %s40, %s41
    %p45 = pneg %p39
    %p46 = scmp.eq.s32.totalorder %s9, 7
    %p47 = por %p45, %p46
    %p48 = scmp.ne.s32.totalorder %s40, %s43
    %p49 = scmp.eq.s32.totalorder %s9, 0
    %p50 = por %p48, %p49
    %p51 = scmp.ne.s32.totalorder %s40, %s43
    %p52 = scmp.eq.s32.totalorder %s14, 7
    %p53 = por %p51, %p52
    %p54 = scmp.ne.s32.totalorder %s43, %s44
    %p55 = scmp.eq.s32.totalorder %s14, 0
    %p56 = por %p54, %p55
    %p57 = scmp.ne.s32.totalorder %s43, %s44
    %p58 = scmp.eq.s32.totalorder %s15, 7
    %p59 = por %p57, %p58
    %p61 = scmp.ne.s32.totalorder %s44, %s60
    %p62 = scmp.eq.s32.totalorder %s15, 0
    %p63 = por %p61, %p62
    %p64 = scmp.lt.s32.totalorder %s18, %s17
    %s65 = scalar_select %p64, %s18, %s17
    %p66 = scmp.lt.s32.totalorder %s27, %s31
    %s67 = scalar_select %p66, %s27, %s31
    %s68 = ssub.s32 %s16, %s35
    %s69 = ssub.s32 %s65, %s67
    %s70 = sor.u32 %s68, %s69
    %p71 = scmp.eq.s32.totalorder %s70, 0
    %s73 = sadd.s32 %s72, 1
    %s74 = scalar_select %p71, %s72, %s73
    %p77 = pneg %p71
    %p78 = scmp.eq.s32.totalorder %s9, 7
    %p79 = por %p77, %p78
    %p80 = scmp.ne.s32.totalorder %s72, %s75
    %p81 = scmp.eq.s32.totalorder %s9, 0
    %p82 = por %p80, %p81
    %p83 = scmp.ne.s32.totalorder %s72, %s75
    %p84 = scmp.eq.s32.totalorder %s14, 7
    %p85 = por %p83, %p84
    %p86 = scmp.ne.s32.totalorder %s75, %s76
    %p87 = scmp.eq.s32.totalorder %s14, 0
    %p88 = por %p86, %p87
    %p89 = scmp.ne.s32.totalorder %s75, %s76
    %p90 = scmp.eq.s32.totalorder %s15, 7
    %p91 = por %p89, %p90
    %p93 = scmp.ne.s32.totalorder %s76, %s92
    %p94 = scmp.eq.s32.totalorder %s15, 0
    %p95 = por %p93, %p94
    %p96 = scmp.lt.s32.totalorder %s18, %s17
    %s97 = scalar_select %p96, %s18, %s17
    %p98 = scmp.lt.s32.totalorder %s27, %s31
    %s99 = scalar_select %p98, %s27, %s31
    %s100 = ssub.s32 %s16, %s35
    %s101 = ssub.s32 %s97, %s99
    %s102 = sor.u32 %s100, %s101
    %p103 = scmp.eq.s32.totalorder %s102, 0
    %s105 = sadd.s32 %s104, 1
    %s106 = scalar_select %p103, %s104, %s105
    %p109 = pneg %p103
    %p110 = scmp.eq.s32.totalorder %s9, 7
    %p111 = por %p109, %p110
    %p112 = scmp.ne.s32.totalorder %s104, %s107
    %p113 = scmp.eq.s32.totalorder %s9, 0
    %p114 = por %p112, %p113
    %p115 = scmp.ne.s32.totalorder %s104, %s107
    %p116 = scmp.eq.s32.totalorder %s14, 7
    %p117 = por %p115, %p116
    %p118 = scmp.ne.s32.totalorder %s107, %s108
    %p119 = scmp.eq.s32.totalorder %s14, 0
    %p120 = por %p118, %p119
    %p121 = scmp.ne.s32.totalorder %s107, %s108
    %p122 = scmp.eq.s32.totalorder %s15, 7
    %p123 = por %p121, %p122
    %p125 = scmp.ne.s32.totalorder %s108, %s124
    %p126 = scmp.eq.s32.totalorder %s15, 0
    %p127 = por %p125, %p126
    %s128 = ssub.s32 %s16, %s35
    %s129 = ssub.s32 %s17, %s31
    %s130 = sor.u32 %s128, %s129
    %p131 = scmp.eq.s32.totalorder %s130, 0
    %s133 = sadd.s32 %s132, 1
    %s134 = scalar_select %p131, %s132, %s133
    %p137 = pneg %p131
    %p138 = scmp.eq.s32.totalorder %s9, 7
    %p139 = por %p137, %p138
    %p140 = scmp.ne.s32.totalorder %s132, %s135
    %p141 = scmp.eq.s32.totalorder %s9, 0
    %p142 = por %p140, %p141
    %p143 = scmp.ne.s32.totalorder %s132, %s135
    %p144 = scmp.eq.s32.totalorder %s14, 7
    %p145 = por %p143, %p144
    %p146 = scmp.ne.s32.totalorder %s135, %s136
    %p147 = scmp.eq.s32.totalorder %s14, 0
    %p148 = por %p146, %p147
    %p149 = scmp.ne.s32.totalorder %s135, %s136
    %p150 = scmp.eq.s32.totalorder %s15, 7
    %p151 = por %p149, %p150
    %p153 = scmp.ne.s32.totalorder %s136, %s152
    %p154 = scmp.eq.s32.totalorder %s15, 0
    %p155 = por %p153, %p154
    %p156 = scmp.le.s32.totalorder 1, %s9
    %p157 = scmp.lt.s32.totalorder %s9, 9
    %p158 = pnand %p156, %p157
    %p159 = pneg %p158
    // Predicated region
    $region9: #{forward.12} parent=5 // pred_check
      _
    $region10: #{forward.12} parent=5 // pred_check_branch
      %161 = sbr.rel (%p158) target = $region12
    $region11: #{forward.12} parent=5 // pred_region
      %s162 = ssub.s32 %s9, 1
    $region12: #{forward.12} parent=5 // pred_fallthru
      _
    %p163 = scmp.lt.s32.totalorder %s9, 8
    // Predicated region
    $region13: #{forward.12} parent=5 // pred_check
      %p164 = pneg %p163
    $region14: #{forward.12} parent=5 // pred_check_branch
      %166 = sbr.rel (%p164) target = $region16
    $region15: #{forward.12} parent=5 // pred_region
      // Predicated region
      $region17: #{forward.12} parent=15 // pred_check
        %p167 = pneg %p50
      $region18: #{forward.12} parent=15 // pred_check_branch
        %169 = sbr.rel (%p167) target = $region20
      $region19: #{forward.12} parent=15 // pred_region
        %p170 = scmp.lt.s32.totalorder %s16, 7
        %s171 = scalar_select %p170, %s16, 7
        %p172 = scmp.lt.s32.totalorder %s17, 0
        %s173 = scalar_select %p172, %s17, 0
        %s174 = sadd.s32 %s173, %s171
        %s175 = smul.addr %s174, 4
        %s176 = scalar_lea.vmem %s0, %s175
      $region20: #{forward.12} parent=15 // pred_fallthru
        _
      // Predicated region
      $region21: #{forward.12} parent=15 // pred_check
        %p177 = pneg %p82
      $region22: #{forward.12} parent=15 // pred_check_branch
        %179 = sbr.rel (%p177) target = $region24
      $region23: #{forward.12} parent=15 // pred_region
        %p180 = scmp.lt.s32.totalorder %s18, %s17
        %s181 = scalar_select %p180, %s18, %s17
        %p182 = scmp.lt.s32.totalorder %s16, 7
        %s183 = scalar_select %p182, %s16, 7
        %p184 = scmp.lt.s32.totalorder %s181, 0
        %s185 = scalar_select %p184, %s181, 0
        %s186 = sadd.s32 %s185, %s183
        %s187 = smul.addr %s186, 4
        %s188 = scalar_lea.vmem %s1, %s187
        %p189 = scmp.lt.s32.totalorder %s18, %s17
        %s190 = scalar_select %p189, %s18, %s17
      $region24: #{forward.12} parent=15 // pred_fallthru
        _
      // Predicated region
      $region25: #{forward.12} parent=15 // pred_check
        %p191 = pneg %p114
      $region26: #{forward.12} parent=15 // pred_check_branch
        %193 = sbr.rel (%p191) target = $region28
      $region27: #{forward.12} parent=15 // pred_region
        %p194 = scmp.lt.s32.totalorder %s18, %s17
        %s195 = scalar_select %p194, %s18, %s17
        %p196 = scmp.lt.s32.totalorder %s16, 7
        %s197 = scalar_select %p196, %s16, 7
        %p198 = scmp.lt.s32.totalorder %s195, 0
        %s199 = scalar_select %p198, %s195, 0
        %s200 = sadd.s32 %s199, %s197
        %s201 = smul.addr %s200, 4
        %s202 = scalar_lea.vmem %s2, %s201
        %p203 = scmp.lt.s32.totalorder %s18, %s17
        %s204 = scalar_select %p203, %s18, %s17
      $region28: #{forward.12} parent=15 // pred_fallthru
        _
    $region16: #{forward.12} parent=5 // pred_fallthru
      _
    %p205 = scmp.le.s32.totalorder 1, %s9
    %p206 = scmp.lt.s32.totalorder %s9, 9
    %p207 = pnand %p205, %p206
    %p208 = pneg %p207
    // Predicated region
    $region29: #{forward.12} parent=5 // pred_check
      _
    $region30: #{forward.12} parent=5 // pred_check_branch
      %210 = sbr.rel (%p207) target = $region32
    $region31: #{forward.12} parent=5 // pred_region
      %s211 = ssub.s32 %s9, 1
      %p212 = scmp.lt.s32.totalorder %s19, 7
      %s213 = scalar_select %p212, %s19, 7
      %p214 = scmp.lt.s32.totalorder %s20, 0
      %s215 = scalar_select %p214, %s20, 0
      %s216 = sadd.s32 %s215, %s213
      %s217 = smul.addr %s216, 4
      %s218 = scalar_lea.vmem %s0, %s217
      %p219 = pneg %p56
      %p220 = pneg %p53
      %p221 = scmp.lt.s32.totalorder %s21, %s20
      %s222 = scalar_select %p221, %s21, %s20
      %p223 = scmp.lt.s32.totalorder %s19, 7
      %s224 = scalar_select %p223, %s19, 7
      %p225 = scmp.lt.s32.totalorder %s222, 0
      %s226 = scalar_select %p225, %s222, 0
      %s227 = sadd.s32 %s226, %s224
      %s228 = smul.addr %s227, 4
      %s229 = scalar_lea.vmem %s1, %s228
      %p230 = pneg %p88
      %p231 = pneg %p85
      %p232 = scmp.lt.s32.totalorder %s21, %s20
      %s233 = scalar_select %p232, %s21, %s20
      %p234 = scmp.lt.s32.totalorder %s19, 7
      %s235 = scalar_select %p234, %s19, 7
      %p236 = scmp.lt.s32.totalorder %s233, 0
      %s237 = scalar_select %p236, %s233, 0
      %s238 = sadd.s32 %s237, %s235
      %s239 = smul.addr %s238, 4
      %s240 = scalar_lea.vmem %s2, %s239
      %p241 = pneg %p120
      %p242 = pneg %p117
      %p243 = pneg %p148
      %p244 = pneg %p145
      %p245 = scmp.lt.s32.totalorder %s19, 7
      %s246 = scalar_select %p245, %s19, 7
      %p247 = scmp.lt.s32.totalorder %s20, 0
      %s248 = scalar_select %p247, %s20, 0
      %s249 = sadd.s32 %s248, %s246
      %s250 = smul.addr %s249, 4
      %s251 = scalar_lea.vmem %s3, %s250
      %p252 = scmp.lt.s32.totalorder %s19, 7
      %s253 = scalar_select %p252, %s19, 7
      %p254 = scmp.lt.s32.totalorder %s20, 0
      %s255 = scalar_select %p254, %s20, 0
      %s256 = sadd.s32 %s255, %s253
      %s257 = smul.addr %s256, 4
      %s258 = scalar_lea.vmem %s0, %s257
      %p259 = scmp.lt.s32.totalorder %s21, %s20
      %s260 = scalar_select %p259, %s21, %s20
      %p261 = scmp.lt.s32.totalorder %s19, 7
      %s262 = scalar_select %p261, %s19, 7
      %p263 = scmp.lt.s32.totalorder %s260, 0
      %s264 = scalar_select %p263, %s260, 0
      %s265 = sadd.s32 %s264, %s262
      %s266 = smul.addr %s265, 4
      %s267 = scalar_lea.vmem %s1, %s266
      %p268 = scmp.lt.s32.totalorder %s21, %s20
      %s269 = scalar_select %p268, %s21, %s20
      %p270 = scmp.lt.s32.totalorder %s21, %s20
      %s271 = scalar_select %p270, %s21, %s20
      %p272 = scmp.lt.s32.totalorder %s19, 7
      %s273 = scalar_select %p272, %s19, 7
      %p274 = scmp.lt.s32.totalorder %s271, 0
      %s275 = scalar_select %p274, %s271, 0
      %s276 = sadd.s32 %s275, %s273
      %s277 = smul.addr %s276, 4
      %s278 = scalar_lea.vmem %s2, %s277
      %p279 = scmp.lt.s32.totalorder %s21, %s20
      %s280 = scalar_select %p279, %s21, %s20
      %p281 = scmp.lt.s32.totalorder %s19, 7
      %s282 = scalar_select %p281, %s19, 7
      %p283 = scmp.lt.s32.totalorder %s20, 0
      %s284 = scalar_select %p283, %s20, 0
      %s285 = sadd.s32 %s284, %s282
      %s286 = smul.addr %s285, 4
      %s287 = scalar_lea.vmem %s3, %s286
      %p289 = scmp.eq.s32.totalorder %s21, 0
      // Predicated region
      $region33: #{forward.12} parent=31 // pred_check
        %p290 = pneg %p289
      $region34: #{forward.12} parent=31 // pred_check_branch
        %292 = sbr.rel (%p290) target = $region36
      $region35: #{forward.12} parent=31 // pred_region
        %vm293 = vcmask 7168
        %294 = vst.msk [vmem:[#allocation2] sm:$0xff] %vm293, -1e+30
        %295 = vst.msk [vmem:[#allocation3] sm:$0xff] %vm293, 0.0
        %vm296 = vcmask 64512
        %297 = vst.msk [vmem:[#allocation4] sm:$0xff] %vm296, 0.0
      $region36: #{forward.12} parent=31 // pred_fallthru
        _
      %s298 = smul.u32 %s20, 8
      %s299 = smul.u32 %s21, 8
      %s300 = sadd.s32 %s298, 8
      %p301 = scmp.lt.s32.totalorder %s299, %s300
      // Predicated region
      $region37: #{forward.12} parent=31 // pred_check
        %p302 = pneg %p301
      $region38: #{forward.12} parent=31 // pred_check_branch
        %304 = sbr.rel (%p302) target = $region40
      $region39: #{forward.12} parent=31 // pred_region
        %v305 = vld [vmem:[%s258] sm:$0xf]
        %v306 = vld [vmem:[%s267] sm:$0xf]
        %vm307 = vcmask 64512
        %v309 = vsel %vm307, %v305, 0
        %v312 = vsel %vm307, %v306, 0
        %314 = vmatprep.subr.bf16.mxu0 0
        %315 = vmatpush1.bf16.xpose.msra.mxu0 %v312
        %316 = vmatprep.subr.bf16.mxu0 0
        %317 = vmatpush1.bf16.xpose.msra.mxu0 0
        %318 = vmatprep.subr.bf16.mxu0 0
        %319 = vmatpush1.bf16.xpose.msra.mxu0 0
        %320 = vmatprep.subr.bf16.mxu0 0
        %321 = vmatpush1.bf16.xpose.msra.mxu0 0
        %322 = vmatprep.subr.bf16.mxu0 0
        %323 = vmatpush1.bf16.xpose.msra.mxu0 0
        %324 = vmatprep.subr.bf16.mxu0 0
        %325 = vmatpush1.bf16.xpose.msra.mxu0 0
        %326 = vmatprep.subr.bf16.mxu0 0
        %327 = vmatpush1.bf16.xpose.msra.mxu0 0
        %328 = vmatprep.subr.bf16.mxu0 0
        %329 = vmatpush1.bf16.xpose.msra.mxu0 0
        %330 = vmatprep.subr.bf16.mxu0 0
        %331 = vmatpush1.bf16.xpose.msra.mxu0 0
        %332 = vmatprep.subr.bf16.mxu0 0
        %333 = vmatpush1.bf16.xpose.msra.mxu0 0
        %334 = vmatprep.subr.bf16.mxu0 0
        %335 = vmatpush1.bf16.xpose.msra.mxu0 0
        %336 = vmatprep.subr.bf16.mxu0 0
        %337 = vmatpush1.bf16.xpose.msra.mxu0 0
        %338 = vmatprep.subr.bf16.mxu0 0
        %339 = vmatpush1.bf16.xpose.msra.mxu0 0
        %340 = vmatprep.subr.bf16.mxu0 0
        %341 = vmatpush1.bf16.xpose.msra.mxu0 0
        %342 = vmatprep.subr.bf16.mxu0 0
        %343 = vmatpush1.bf16.xpose.msra.mxu0 0
        %344 = vmatprep.subr.bf16.mxu0 0
        %345 = vmatpush1.bf16.xpose.msra.mxu0 0
        %346 = vmatprep.mubr.bf16.mxu0 0
        %347 = vmatmul.mubr.bf16.gmra.mrb[0].mxu0 %v309
        %v348 = vpop.f32.mrb[0].mxu0
        %v349 = vadd.f32 0.0, %v348
        %v350 = vpop.f32.mrb[0].mxu0
        %v351 = vpop.f32.mrb[0].mxu0
        %v352 = vpop.f32.mrb[0].mxu0
        %353 = vdwg.mxu0
        %v354 = vmul.f32 %v349, 0.35355338
        %v355 = vlaneseq
        %v356 = vshrl.u32 %v355, 7
        %v357 = vstv %s298
        %v358 = vadd.s32 %v357, %v356
        %v359 = vlaneseq
        %v360 = vand.u32 %v359, 127
        %v361 = vstv %s299
        %v362 = vadd.s32 %v361, %v360
        %vm363 = vcmp.gt.s32.totalorder %v362, %v358
        %v364 = vsel %vm363, -1e+30, %v354
        %v365 = vld [vmem:[#allocation2] sm:$0xff]
        %v366 = vsel %vm307, %v364, -inf
        %367 = vmax.xlane.f32.xlu0 %v366
        %v368 = vpop.xlane.xlu0 %367
        %v369 = vmax.f32 %v365, %v368
        %v370 = vsub.f32 %v365, %v369
        %v371 = vmul.f32 %v370, 1.442695
        %v372 = vpow.pop %v371
        %374 = vset.pattern.permute.xlu0 0
        %375 = vperm.xlu0 %374, %v369
        %v376 = vpop.permute.xlu0 %375
        %v378 = vsub.f32 %v364, %v376
        %v379 = vmul.f32 %v378, 1.442695
        %v380 = vpow.pop %v379
        %v381 = vld [vmem:[#allocation3] sm:$0xff]
        %v382 = vmul.f32 %v372, %v381
        %v383 = vsel %vm307, %v380, 0.0
        %384 = vadd.xlane.f32.xlu0 %v383
        %v385 = vpop.xlane.xlu0 %384
        %v386 = vadd.f32 %v382, %v385
        %vm387 = vcmask 7168
        %388 = vst.msk [vmem:[#allocation3] sm:$0xff] %vm387, %v386
        %v389 = vld [vmem:[#allocation4] sm:$0xff]
        %391 = vset.pattern.permute.xlu0 0
        %392 = vperm.xlu0 %391, %v372
        %v393 = vpop.permute.xlu0 %392
        %v395 = vmul.f32 %v393, %v389
        %v396 = vpack.c.bf16 %v380, %v380
        %v397 = vld [vmem:[%s278] sm:$0xf]
        %v399 = vsel %vm307, %v396, 0
        %vm401 = vcmask 1043456
        %v403 = vsel %vm401, %v397, 0
        %405 = vmatprep.subr.bf16.mxu0 0
        %406 = vmatpush1.bf16.msra.mxu0 %v403
        %407 = vmatprep.subr.bf16.mxu0 0
        %408 = vmatpush1.bf16.msra.mxu0 0
        %409 = vmatprep.subr.bf16.mxu0 0
        %410 = vmatpush1.bf16.msra.mxu0 0
        %411 = vmatprep.subr.bf16.mxu0 0
        %412 = vmatpush1.bf16.msra.mxu0 0
        %413 = vmatprep.subr.bf16.mxu0 0
        %414 = vmatpush1.bf16.msra.mxu0 0
        %415 = vmatprep.subr.bf16.mxu0 0
        %416 = vmatpush1.bf16.msra.mxu0 0
        %417 = vmatprep.subr.bf16.mxu0 0
        %418 = vmatpush1.bf16.msra.mxu0 0
        %419 = vmatprep.subr.bf16.mxu0 0
        %420 = vmatpush1.bf16.msra.mxu0 0
        %421 = vmatprep.subr.bf16.mxu0 0
        %422 = vmatpush1.bf16.msra.mxu0 0
        %423 = vmatprep.subr.bf16.mxu0 0
        %424 = vmatpush1.bf16.msra.mxu0 0
        %425 = vmatprep.subr.bf16.mxu0 0
        %426 = vmatpush1.bf16.msra.mxu0 0
        %427 = vmatprep.subr.bf16.mxu0 0
        %428 = vmatpush1.bf16.msra.mxu0 0
        %429 = vmatprep.subr.bf16.mxu0 0
        %430 = vmatpush1.bf16.msra.mxu0 0
        %431 = vmatprep.subr.bf16.mxu0 0
        %432 = vmatpush1.bf16.msra.mxu0 0
        %433 = vmatprep.subr.bf16.mxu0 0
        %434 = vmatpush1.bf16.msra.mxu0 0
        %435 = vmatprep.subr.bf16.mxu0 0
        %436 = vmatpush1.bf16.msra.mxu0 0
        %437 = vmatprep.mubr.bf16.mxu0 0
        %438 = vmatmul.mubr.bf16.gmra.mrb[0].mxu0 %v399
        %v439 = vpop.f32.mrb[0].mxu0
        %v440 = vadd.f32 0.0, %v439
        %v441 = vpop.f32.mrb[0].mxu0
        %v442 = vpop.f32.mrb[0].mxu0
        %v443 = vpop.f32.mrb[0].mxu0
        %444 = vdwg.mxu0
        %v445 = vadd.f32 %v395, %v440
        %446 = vst.msk [vmem:[#allocation4] sm:$0xff] %vm307, %v445
        %447 = vst.msk [vmem:[#allocation2] sm:$0xff] %vm387, %v369
      $region40: #{forward.12} parent=31 // pred_fallthru
        _
      // Predicated region
      $region41: #{forward.12} parent=31 // pred_check
        %p448 = pneg %p289
      $region42: #{forward.12} parent=31 // pred_check_branch
        %450 = sbr.rel (%p448) target = $region44
      $region43: #{forward.12} parent=31 // pred_region
        %v451 = vld [vmem:[#allocation4] sm:$0xff]
        %v452 = vld [vmem:[#allocation3] sm:$0xff]
        %v453 = vrcp.pop %v452
        %455 = vset.pattern.permute.xlu0 0
        %456 = vperm.xlu0 %455, %v453
        %v457 = vpop.permute.xlu0 %456
        %v459 = vmul.f32 %v451, %v457
        %v460 = vpack.c.bf16 %v459, %v459
        %vm461 = vcmask 60416
        %462 = vst.msk [vmem:[%s287] sm:$0xf] %vm461, %v460
      $region44: #{forward.12} parent=31 // pred_fallthru
        _
      %p463 = scmp.lt.s32.totalorder %s19, 7
      %s464 = scalar_select %p463, %s19, 7
      %p465 = scmp.lt.s32.totalorder %s20, 0
      %s466 = scalar_select %p465, %s20, 0
      %s467 = sadd.s32 %s466, %s464
      %s468 = smul.addr %s467, 4
      %s469 = scalar_lea.vmem %s3, %s468
      // Predicated region
      $region45: #{forward.12} parent=31 // pred_check
        %p470 = pneg %p145
      $region46: #{forward.12} parent=31 // pred_check_branch
        %472 = sbr.rel (%p470) target = $region48
      $region47: #{forward.12} parent=31 // pred_region
        _
      $region48: #{forward.12} parent=31 // pred_fallthru
        _
    $region32: #{forward.12} parent=5 // pred_fallthru
      _
    %p473 = scmp.le.s32.totalorder 2, %s9
    // Predicated region
    $region49: #{forward.12} parent=5 // pred_check
      %p474 = pneg %p473
    $region50: #{forward.12} parent=5 // pred_check_branch
      %476 = sbr.rel (%p474) target = $region52
    $region51: #{forward.12} parent=5 // pred_region
      %s477 = ssub.s32 %s9, 2
      // Predicated region
      $region53: #{forward.12} parent=51 // pred_check
        %p478 = pneg %p151
      $region54: #{forward.12} parent=51 // pred_check_branch
        %480 = sbr.rel (%p478) target = $region56
      $region55: #{forward.12} parent=51 // pred_region
        %p481 = scmp.lt.s32.totalorder %s22, 7
        %s482 = scalar_select %p481, %s22, 7
        %p483 = scmp.lt.s32.totalorder %s23, 0
        %s484 = scalar_select %p483, %s23, 0
        %s485 = sadd.s32 %s484, %s482
        %s486 = smul.addr %s485, 4
        %s487 = scalar_lea.vmem %s3, %s486
      $region56: #{forward.12} parent=51 // pred_fallthru
        _
    $region52: #{forward.12} parent=5 // pred_fallthru
      _
  $region6: #{forward.12} parent=0 // loop_footer
    %s13 = sadd.s32 1, %s9
  $region7: #{forward.12} parent=0 // loop_footer_branch
    %8 = sbr.rel target = $region3
  $region8: #{forward.12} parent=0 // loop_exit
    _

// kernel: forward.11
$region0: #{forward.11}
  #allocation0 [shape = 'u32[]', space=smem, size = 0x4, offset = 0x4, fixed_abs, tag = 'smem constant byte address 0x4 - core index']
  #allocation1 [shape = 'u32[144,128]{1,0:T(1,128)}', space=vmem, size = 0x12000, scoped, tag = 'internal scratch']
  #allocation2 [shape = 'bf16[16,32]{1,0:T(16,128)(2,1)}', space=vmem, size = 0x1000, scoped, tag = 'scratch operand']
  %s0 = inlined_call_operand.vmem [shape: bf16[16,32], index: 0, kind: input, shape index: {}]
  %s1 = inlined_call_operand.vmem [shape: f32[1,32], index: 1, kind: input, shape index: {}]
  %s2 = inlined_call_operand.vmem [shape: f32[1,32], index: 2, kind: input, shape index: {}]
  %s3 = inlined_call_operand.vmem [shape: bf16[32,96], index: 3, kind: input, shape index: {}]
  %s4 = inlined_call_operand.vmem [shape: f32[1,96], index: 4, kind: input, shape index: {}]
  %s5 = inlined_call_operand.vmem [shape: bf16[16,96], index: 5, kind: output, shape index: {}]
  %s6 = sld [smem:[#allocation0]]
  $region34: #{forward.11} parent=0
    _
  %s8 = ssub.s32 1, %s6
  %s9 = scalar_select 0, %s8, %s6
  // Predicated region
  $region2: #{forward.11} parent=0 // pred_check
    _
  $region3: #{forward.11} parent=0 // pred_check_branch
    %11 = sbr.rel (0) target = $region5
  $region4: #{forward.11} parent=0 // pred_region
    _
  $region5: #{forward.11} parent=0 // pred_fallthru
    _
  // Predicated region
  $region6: #{forward.11} parent=0 // pred_check
    _
  $region7: #{forward.11} parent=0 // pred_check_branch
    %13 = sbr.rel (0) target = $region9
  $region8: #{forward.11} parent=0 // pred_region
    _
  $region9: #{forward.11} parent=0 // pred_fallthru
    _
  // Predicated region
  $region10: #{forward.11} parent=0 // pred_check
    _
  $region11: #{forward.11} parent=0 // pred_check_branch
    %15 = sbr.rel (0) target = $region13
  $region12: #{forward.11} parent=0 // pred_region
    _
  $region13: #{forward.11} parent=0 // pred_fallthru
    _
  // Predicated region
  $region14: #{forward.11} parent=0 // pred_check
    _
  $region15: #{forward.11} parent=0 // pred_check_branch
    %17 = sbr.rel (0) target = $region17
  $region16: #{forward.11} parent=0 // pred_region
    _
  $region17: #{forward.11} parent=0 // pred_fallthru
    _
  // Predicated region
  $region18: #{forward.11} parent=0 // pred_check
    _
  $region19: #{forward.11} parent=0 // pred_check_branch
    %19 = sbr.rel (0) target = $region21
  $region20: #{forward.11} parent=0 // pred_region
    _
  $region21: #{forward.11} parent=0 // pred_fallthru
    _
  %p21 = scmp.eq.s32.totalorder 0, 0
  // Predicated region
  $region22: #{forward.11} parent=0 // pred_check
    %p22 = pneg %p21
  $region23: #{forward.11} parent=0 // pred_check_branch
    %24 = sbr.rel (%p22) target = $region25
  $region24: #{forward.11} parent=0 // pred_region
    %v25 = vld [vmem:[%s0] sm:$0xf]
    %v26 = vld [vmem:[%s0 + $0x4] sm:$0xf]
    %v27 = vunpack.c.l.bf16 %v25
    %v28 = vunpack.c.l.bf16 %v26
    %vm29 = vcmask 261120
    %v30 = vsel %vm29, %v27, 0.0
    %31 = vadd.xlane.f32.xlu0 %v30
    %v32 = vpop.xlane.xlu0 %31
    %v33 = vsel %vm29, %v28, 0.0
    %34 = vadd.xlane.f32.xlu0 %v33
    %v35 = vpop.xlane.xlu0 %34
    %v36 = vrcp.pop 32.0
    %v37 = vmul.f32 %v32, %v36
    %v38 = vmul.f32 %v35, %v36
    %v39 = vsub.f32 %v27, %v37
    %v40 = vsub.f32 %v28, %v38
    %v41 = vmul.f32 %v39, %v39
    %v42 = vmul.f32 %v40, %v40
    %v43 = vsel %vm29, %v41, 0.0
    %44 = vadd.xlane.f32.xlu0 %v43
    %v45 = vpop.xlane.xlu0 %44
    %v46 = vsel %vm29, %v42, 0.0
    %47 = vadd.xlane.f32.xlu0 %v46
    %v48 = vpop.xlane.xlu0 %47
    %v49 = vmul.f32 %v45, %v36
    %v50 = vmul.f32 %v48, %v36
    %v51 = vadd.f32 %v49, 1e-05
    %v52 = vadd.f32 %v50, 1e-05
    %v53 = vrsqrt.pop %v51
    %v54 = vrsqrt.pop %v52
    %v55 = vmul.f32 %v39, %v53
    %v56 = vmul.f32 %v40, %v54
    %v57 = vld [vmem:[%s1] sm:$0x1]
    %v59 = vlaneseq
    %v60 = vshrl.u32 %v59, 7
    %v61 = vsub.s32 0, %v60
    %v62 = vrot.slane %v57, %v61
    %v64 = vmul.f32 %v55, %v62
    %v65 = vmul.f32 %v56, %v62
    %v66 = vld [vmem:[%s2] sm:$0x1]
    %v68 = vlaneseq
    %v69 = vshrl.u32 %v68, 7
    %v70 = vsub.s32 0, %v69
    %v71 = vrot.slane %v66, %v70
    %v73 = vadd.f32 %v64, %v71
    %v74 = vadd.f32 %v65, %v71
    %v75 = vpack.c.bf16 %v74, %v73
    %76 = vst.msk [vmem:[#allocation2] sm:$0xff] %vm29, %v75
  $region25: #{forward.11} parent=0 // pred_fallthru
    _
  %v77 = vld [vmem:[#allocation2] sm:$0xff]
  %v78 = vld [vmem:[%s3] sm:$0xf]
  %v79 = vld [vmem:[%s3 + $0x4] sm:$0xf]
  %v80 = vld [vmem:[%s3 + $0x8] sm:$0xf]
  %v81 = vld [vmem:[%s3 + $0xc] sm:$0xf]
  %v82 = vld [vmem:[%s4] sm:$0x1]
  %v84 = vlaneseq
  %v85 = vshrl.u32 %v84, 7
  %v86 = vsub.s32 0, %v85
  %v87 = vrot.slane %v82, %v86
  %v93 = vunpack.c.l.b16 %v78
  %v94 = vunpack.c.l.b16 %v79
  %v95 = vunpack.c.l.b16 %v80
  %v96 = vunpack.c.l.b16 %v81
  %v97 = vpack.c.b16 %v94, %v93
  %v98 = vpack.c.b16 %v96, %v95
  %vm101 = vcmask 261120
  %v103 = vsel %vm101, %v77, 0
  %105 = vmatprep.subr.bf16.mxu0 0
  %106 = vmatpush1.bf16.msra.mxu0 %v97
  %107 = vmatprep.subr.bf16.mxu0 0
  %108 = vmatpush1.bf16.msra.mxu0 %v98
  %109 = vmatprep.subr.bf16.mxu0 0
  %110 = vmatpush1.bf16.msra.mxu0 0
  %111 = vmatprep.subr.bf16.mxu0 0
  %112 = vmatpush1.bf16.msra.mxu0 0
  %113 = vmatprep.subr.bf16.mxu0 0
  %114 = vmatpush1.bf16.msra.mxu0 0
  %115 = vmatprep.subr.bf16.mxu0 0
  %116 = vmatpush1.bf16.msra.mxu0 0
  %117 = vmatprep.subr.bf16.mxu0 0
  %118 = vmatpush1.bf16.msra.mxu0 0
  %119 = vmatprep.subr.bf16.mxu0 0
  %120 = vmatpush1.bf16.msra.mxu0 0
  %121 = vmatprep.subr.bf16.mxu0 0
  %122 = vmatpush1.bf16.msra.mxu0 0
  %123 = vmatprep.subr.bf16.mxu0 0
  %124 = vmatpush1.bf16.msra.mxu0 0
  %125 = vmatprep.subr.bf16.mxu0 0
  %126 = vmatpush1.bf16.msra.mxu0 0
  %127 = vmatprep.subr.bf16.mxu0 0
  %128 = vmatpush1.bf16.msra.mxu0 0
  %129 = vmatprep.subr.bf16.mxu0 0
  %130 = vmatpush1.bf16.msra.mxu0 0
  %131 = vmatprep.subr.bf16.mxu0 0
  %132 = vmatpush1.bf16.msra.mxu0 0
  %133 = vmatprep.subr.bf16.mxu0 0
  %134 = vmatpush1.bf16.msra.mxu0 0
  %135 = vmatprep.subr.bf16.mxu0 0
  %136 = vmatpush1.bf16.msra.mxu0 0
  %137 = vmatprep.mubr.bf16.mxu0 0
  %138 = vmatmul.mubr.bf16.gmra.mrb[0].mxu0 %v103
  %v139 = vpop.f32.mrb[0].mxu0
  %v140 = vadd.f32 %v87, %v139
  %v141 = vpop.f32.mrb[0].mxu0
  %v142 = vpop.f32.mrb[0].mxu0
  %v143 = vadd.f32 %v87, %v142
  %v144 = vpop.f32.mrb[0].mxu0
  %145 = vdwg.mxu0
  %v146 = vpack.c.bf16 %v143, %v140
  %v148 = vunpack.c.l.b16 %v146
  %v149 = vunpack.c.h.b16 %v146
  %v150 = vpack.c.b16 %v148, %v148
  %v151 = vpack.c.b16 %v149, %v149
  %vm154 = vcmask 781312
  %155 = vst.msk [vmem:[%s5] sm:$0xf] %vm154, %v150
  %156 = vst.msk [vmem:[%s5 + $0x4] sm:$0xf] %vm154, %v151
  // Predicated region
  $region26: #{forward.11} parent=0 // pred_check
    _
  $region27: #{forward.11} parent=0 // pred_check_branch
    %158 = sbr.rel (0) target = $region29
  $region28: #{forward.11} parent=0 // pred_region
    _
  $region29: #{forward.11} parent=0 // pred_fallthru
    _
  // Predicated region
  $region30: #{forward.11} parent=0 // pred_check
    _
  $region31: #{forward.11} parent=0 // pred_check_branch
    %160 = sbr.rel (0) target = $region33
  $region32: #{forward.11} parent=0 // pred_region
    _
  $region33: #{forward.11} parent=0 // pred_fallthru
    _

// kernel: forward.13
$region0: #{forward.13}
  #allocation0 [shape = 'u32[]', space=smem, size = 0x4, offset = 0x4, fixed_abs, tag = 'smem constant byte address 0x4 - core index']
  #allocation1 [shape = 'u32[144,128]{1,0:T(1,128)}', space=vmem, size = 0x12000, scoped, tag = 'internal scratch']
  #allocation2 [shape = 'f32[16,32]{1,0:T(8,128)}', space=vmem, size = 0x2000, scoped, tag = 'scratch operand']
  %s0 = inlined_call_operand.vmem [shape: bf16[16,32], index: 0, kind: input, shape index: {}]
  %s1 = inlined_call_operand.vmem [shape: bf16[32,32], index: 1, kind: input, shape index: {}]
  %s2 = inlined_call_operand.vmem [shape: f32[1,32], index: 2, kind: input, shape index: {}]
  %s3 = inlined_call_operand.vmem [shape: bf16[16,32], index: 3, kind: input, shape index: {}]
  %s4 = inlined_call_operand.vmem [shape: bf16[16,32], index: 4, kind: output, shape index: {}]
  %s5 = sld [smem:[#allocation0]]
  $region34: #{forward.13} parent=0
    _
  %s7 = ssub.s32 1, %s5
  %s8 = scalar_select 0, %s7, %s5
  // Predicated region
  $region2: #{forward.13} parent=0 // pred_check
    _
  $region3: #{forward.13} parent=0 // pred_check_branch
    %10 = sbr.rel (0) target = $region5
  $region4: #{forward.13} parent=0 // pred_region
    _
  $region5: #{forward.13} parent=0 // pred_fallthru
    _
  // Predicated region
  $region6: #{forward.13} parent=0 // pred_check
    _
  $region7: #{forward.13} parent=0 // pred_check_branch
    %12 = sbr.rel (0) target = $region9
  $region8: #{forward.13} parent=0 // pred_region
    _
  $region9: #{forward.13} parent=0 // pred_fallthru
    _
  // Predicated region
  $region10: #{forward.13} parent=0 // pred_check
    _
  $region11: #{forward.13} parent=0 // pred_check_branch
    %14 = sbr.rel (0) target = $region13
  $region12: #{forward.13} parent=0 // pred_region
    _
  $region13: #{forward.13} parent=0 // pred_fallthru
    _
  // Predicated region
  $region14: #{forward.13} parent=0 // pred_check
    _
  $region15: #{forward.13} parent=0 // pred_check_branch
    %16 = sbr.rel (0) target = $region17
  $region16: #{forward.13} parent=0 // pred_region
    _
  $region17: #{forward.13} parent=0 // pred_fallthru
    _
  %p18 = scmp.eq.s32.totalorder 0, 0
  // Predicated region
  $region18: #{forward.13} parent=0 // pred_check
    %p19 = pneg %p18
  $region19: #{forward.13} parent=0 // pred_check_branch
    %21 = sbr.rel (%p19) target = $region21
  $region20: #{forward.13} parent=0 // pred_region
    %vm22 = vcmask 261120
    %23 = vst.msk [vmem:[#allocation2] sm:$0xff] %vm22, 0.0
    %24 = vst.msk [vmem:[#allocation2 + $0x8] sm:$0xff] %vm22, 0.0
  $region21: #{forward.13} parent=0 // pred_fallthru
    _
  %v25 = vld [vmem:[#allocation2] sm:$0xff]
  %v26 = vld [vmem:[#allocation2 + $0x8] sm:$0xff]
  %v27 = vld [vmem:[%s0] sm:$0xf]
  %v28 = vld [vmem:[%s0 + $0x4] sm:$0xf]
  %v29 = vld [vmem:[%s1] sm:$0xf]
  %v30 = vld [vmem:[%s1 + $0x4] sm:$0xf]
  %v31 = vld [vmem:[%s1 + $0x8] sm:$0xf]
  %v32 = vld [vmem:[%s1 + $0xc] sm:$0xf]
  %v35 = vunpack.c.l.b16 %v27
  %v36 = vunpack.c.l.b16 %v28
  %v37 = vpack.c.b16 %v36, %v35
  %v42 = vunpack.c.l.b16 %v29
  %v43 = vunpack.c.l.b16 %v30
  %v44 = vunpack.c.l.b16 %v31
  %v45 = vunpack.c.l.b16 %v32
  %v46 = vpack.c.b16 %v43, %v42
  %v47 = vpack.c.b16 %v45, %v44
  %vm50 = vcmask 261120
  %v52 = vsel %vm50, %v37, 0
  %54 = vmatprep.subr.bf16.mxu0 0
  %55 = vmatpush1.bf16.msra.mxu0 %v46
  %56 = vmatprep.subr.bf16.mxu0 0
  %57 = vmatpush1.bf16.msra.mxu0 %v47
  %58 = vmatprep.subr.bf16.mxu0 0
  %59 = vmatpush1.bf16.msra.mxu0 0
  %60 = vmatprep.subr.bf16.mxu0 0
  %61 = vmatpush1.bf16.msra.mxu0 0
  %62 = vmatprep.subr.bf16.mxu0 0
  %63 = vmatpush1.bf16.msra.mxu0 0
  %64 = vmatprep.subr.bf16.mxu0 0
  %65 = vmatpush1.bf16.msra.mxu0 0
  %66 = vmatprep.subr.bf16.mxu0 0
  %67 = vmatpush1.bf16.msra.mxu0 0
  %68 = vmatprep.subr.bf16.mxu0 0
  %69 = vmatpush1.bf16.msra.mxu0 0
  %70 = vmatprep.subr.bf16.mxu0 0
  %71 = vmatpush1.bf16.msra.mxu0 0
  %72 = vmatprep.subr.bf16.mxu0 0
  %73 = vmatpush1.bf16.msra.mxu0 0
  %74 = vmatprep.subr.bf16.mxu0 0
  %75 = vmatpush1.bf16.msra.mxu0 0
  %76 = vmatprep.subr.bf16.mxu0 0
  %77 = vmatpush1.bf16.msra.mxu0 0
  %78 = vmatprep.subr.bf16.mxu0 0
  %79 = vmatpush1.bf16.msra.mxu0 0
  %80 = vmatprep.subr.bf16.mxu0 0
  %81 = vmatpush1.bf16.msra.mxu0 0
  %82 = vmatprep.subr.bf16.mxu0 0
  %83 = vmatpush1.bf16.msra.mxu0 0
  %84 = vmatprep.subr.bf16.mxu0 0
  %85 = vmatpush1.bf16.msra.mxu0 0
  %86 = vmatprep.mubr.bf16.mxu0 0
  %87 = vmatmul.mubr.bf16.gmra.mrb[0].mxu0 %v52
  %v88 = vpop.f32.mrb[0].mxu0
  %v89 = vadd.f32 0.0, %v88
  %v90 = vpop.f32.mrb[0].mxu0
  %v91 = vpop.f32.mrb[0].mxu0
  %v92 = vadd.f32 0.0, %v91
  %v93 = vpop.f32.mrb[0].mxu0
  %94 = vdwg.mxu0
  %v95 = vadd.f32 %v25, %v89
  %v96 = vadd.f32 %v26, %v92
  %97 = vst.msk [vmem:[#allocation2] sm:$0xff] %vm50, %v95
  %98 = vst.msk [vmem:[#allocation2 + $0x8] sm:$0xff] %vm50, %v96
  // Predicated region
  $region22: #{forward.13} parent=0 // pred_check
    %p99 = pneg %p18
  $region23: #{forward.13} parent=0 // pred_check_branch
    %101 = sbr.rel (%p99) target = $region25
  $region24: #{forward.13} parent=0 // pred_region
    %v102 = vld [vmem:[#allocation2] sm:$0xff]
    %v103 = vld [vmem:[#allocation2 + $0x8] sm:$0xff]
    %v104 = vld [vmem:[%s2] sm:$0x1]
    %v106 = vlaneseq
    %v107 = vshrl.u32 %v106, 7
    %v108 = vsub.s32 0, %v107
    %v109 = vrot.slane %v104, %v108
    %v111 = vadd.f32 %v102, %v109
    %v112 = vadd.f32 %v103, %v109
    %v113 = vld [vmem:[%s3] sm:$0xf]
    %v114 = vld [vmem:[%s3 + $0x4] sm:$0xf]
    %v115 = vunpack.c.l.bf16 %v113
    %v116 = vunpack.c.l.bf16 %v114
    %v117 = vadd.f32 %v111, %v115
    %v118 = vadd.f32 %v112, %v116
    %v119 = vpack.c.bf16 %v118, %v117
    %v121 = vunpack.c.l.b16 %v119
    %v122 = vunpack.c.h.b16 %v119
    %v123 = vpack.c.b16 %v121, %v121
    %v124 = vpack.c.b16 %v122, %v122
    %vm127 = vcmask 257024
    %128 = vst.msk [vmem:[%s4] sm:$0xf] %vm127, %v123
    %129 = vst.msk [vmem:[%s4 + $0x4] sm:$0xf] %vm127, %v124
  $region25: #{forward.13} parent=0 // pred_fallthru
    _
  // Predicated region
  $region26: #{forward.13} parent=0 // pred_check
    _
  $region27: #{forward.13} parent=0 // pred_check_branch
    %131 = sbr.rel (0) target = $region29
  $region28: #{forward.13} parent=0 // pred_region
    _
  $region29: #{forward.13} parent=0 // pred_fallthru
    _
  // Predicated region
  $region30: #{forward.13} parent=0 // pred_check
    _
  $region31: #{forward.13} parent=0 // pred_check_branch
    %133 = sbr.rel (0) target = $region33
  $region32: #{forward.13} parent=0 // pred_region
    _
  $region33: #{forward.13} parent=0 // pred_fallthru
    _

// kernel: forward.14
$region0: #{forward.14}
  #allocation0 [shape = 'u32[]', space=smem, size = 0x4, offset = 0x4, fixed_abs, tag = 'smem constant byte address 0x4 - core index']
  #allocation1 [shape = 'u32[144,128]{1,0:T(1,128)}', space=vmem, size = 0x12000, scoped, tag = 'internal scratch']
  #allocation2 [shape = 'bf16[16,32]{1,0:T(16,128)(2,1)}', space=vmem, size = 0x1000, scoped, tag = 'scratch operand']
  %s0 = inlined_call_operand.vmem [shape: bf16[16,32], index: 0, kind: input, shape index: {}]
  %s1 = inlined_call_operand.vmem [shape: f32[1,32], index: 1, kind: input, shape index: {}]
  %s2 = inlined_call_operand.vmem [shape: f32[1,32], index: 2, kind: input, shape index: {}]
  %s3 = inlined_call_operand.vmem [shape: bf16[32,64], index: 3, kind: input, shape index: {}]
  %s4 = inlined_call_operand.vmem [shape: f32[1,64], index: 4, kind: input, shape index: {}]
  %s5 = inlined_call_operand.vmem [shape: bf16[16,64], index: 5, kind: output, shape index: {}]
  %s6 = sld [smem:[#allocation0]]
  $region34: #{forward.14} parent=0
    _
  %s8 = ssub.s32 1, %s6
  %s9 = scalar_select 0, %s8, %s6
  // Predicated region
  $region2: #{forward.14} parent=0 // pred_check
    _
  $region3: #{forward.14} parent=0 // pred_check_branch
    %11 = sbr.rel (0) target = $region5
  $region4: #{forward.14} parent=0 // pred_region
    _
  $region5: #{forward.14} parent=0 // pred_fallthru
    _
  // Predicated region
  $region6: #{forward.14} parent=0 // pred_check
    _
  $region7: #{forward.14} parent=0 // pred_check_branch
    %13 = sbr.rel (0) target = $region9
  $region8: #{forward.14} parent=0 // pred_region
    _
  $region9: #{forward.14} parent=0 // pred_fallthru
    _
  // Predicated region
  $region10: #{forward.14} parent=0 // pred_check
    _
  $region11: #{forward.14} parent=0 // pred_check_branch
    %15 = sbr.rel (0) target = $region13
  $region12: #{forward.14} parent=0 // pred_region
    _
  $region13: #{forward.14} parent=0 // pred_fallthru
    _
  // Predicated region
  $region14: #{forward.14} parent=0 // pred_check
    _
  $region15: #{forward.14} parent=0 // pred_check_branch
    %17 = sbr.rel (0) target = $region17
  $region16: #{forward.14} parent=0 // pred_region
    _
  $region17: #{forward.14} parent=0 // pred_fallthru
    _
  // Predicated region
  $region18: #{forward.14} parent=0 // pred_check
    _
  $region19: #{forward.14} parent=0 // pred_check_branch
    %19 = sbr.rel (0) target = $region21
  $region20: #{forward.14} parent=0 // pred_region
    _
  $region21: #{forward.14} parent=0 // pred_fallthru
    _
  %p21 = scmp.eq.s32.totalorder 0, 0
  // Predicated region
  $region22: #{forward.14} parent=0 // pred_check
    %p22 = pneg %p21
  $region23: #{forward.14} parent=0 // pred_check_branch
    %24 = sbr.rel (%p22) target = $region25
  $region24: #{forward.14} parent=0 // pred_region
    %v25 = vld [vmem:[%s0] sm:$0xf]
    %v26 = vld [vmem:[%s0 + $0x4] sm:$0xf]
    %v27 = vunpack.c.l.bf16 %v25
    %v28 = vunpack.c.l.bf16 %v26
    %vm29 = vcmask 261120
    %v30 = vsel %vm29, %v27, 0.0
    %31 = vadd.xlane.f32.xlu0 %v30
    %v32 = vpop.xlane.xlu0 %31
    %v33 = vsel %vm29, %v28, 0.0
    %34 = vadd.xlane.f32.xlu0 %v33
    %v35 = vpop.xlane.xlu0 %34
    %v36 = vrcp.pop 32.0
    %v37 = vmul.f32 %v32, %v36
    %v38 = vmul.f32 %v35, %v36
    %v39 = vsub.f32 %v27, %v37
    %v40 = vsub.f32 %v28, %v38
    %v41 = vmul.f32 %v39, %v39
    %v42 = vmul.f32 %v40, %v40
    %v43 = vsel %vm29, %v41, 0.0
    %44 = vadd.xlane.f32.xlu0 %v43
    %v45 = vpop.xlane.xlu0 %44
    %v46 = vsel %vm29, %v42, 0.0
    %47 = vadd.xlane.f32.xlu0 %v46
    %v48 = vpop.xlane.xlu0 %47
    %v49 = vmul.f32 %v45, %v36
    %v50 = vmul.f32 %v48, %v36
    %v51 = vadd.f32 %v49, 1e-05
    %v52 = vadd.f32 %v50, 1e-05
    %v53 = vrsqrt.pop %v51
    %v54 = vrsqrt.pop %v52
    %v55 = vmul.f32 %v39, %v53
    %v56 = vmul.f32 %v40, %v54
    %v57 = vld [vmem:[%s1] sm:$0x1]
    %v59 = vlaneseq
    %v60 = vshrl.u32 %v59, 7
    %v61 = vsub.s32 0, %v60
    %v62 = vrot.slane %v57, %v61
    %v64 = vmul.f32 %v55, %v62
    %v65 = vmul.f32 %v56, %v62
    %v66 = vld [vmem:[%s2] sm:$0x1]
    %v68 = vlaneseq
    %v69 = vshrl.u32 %v68, 7
    %v70 = vsub.s32 0, %v69
    %v71 = vrot.slane %v66, %v70
    %v73 = vadd.f32 %v64, %v71
    %v74 = vadd.f32 %v65, %v71
    %v75 = vpack.c.bf16 %v74, %v73
    %76 = vst.msk [vmem:[#allocation2] sm:$0xff] %vm29, %v75
  $region25: #{forward.14} parent=0 // pred_fallthru
    _
  %v77 = vld [vmem:[#allocation2] sm:$0xff]
  %v78 = vld [vmem:[%s3] sm:$0xf]
  %v79 = vld [vmem:[%s3 + $0x4] sm:$0xf]
  %v80 = vld [vmem:[%s3 + $0x8] sm:$0xf]
  %v81 = vld [vmem:[%s3 + $0xc] sm:$0xf]
  %v82 = vld [vmem:[%s4] sm:$0x1]
  %v84 = vlaneseq
  %v85 = vshrl.u32 %v84, 7
  %v86 = vsub.s32 0, %v85
  %v87 = vrot.slane %v82, %v86
  %v93 = vunpack.c.l.b16 %v78
  %v94 = vunpack.c.l.b16 %v79
  %v95 = vunpack.c.l.b16 %v80
  %v96 = vunpack.c.l.b16 %v81
  %v97 = vpack.c.b16 %v94, %v93
  %v98 = vpack.c.b16 %v96, %v95
  %vm101 = vcmask 261120
  %v103 = vsel %vm101, %v77, 0
  %105 = vmatprep.subr.bf16.mxu0 0
  %106 = vmatpush1.bf16.msra.mxu0 %v97
  %107 = vmatprep.subr.bf16.mxu0 0
  %108 = vmatpush1.bf16.msra.mxu0 %v98
  %109 = vmatprep.subr.bf16.mxu0 0
  %110 = vmatpush1.bf16.msra.mxu0 0
  %111 = vmatprep.subr.bf16.mxu0 0
  %112 = vmatpush1.bf16.msra.mxu0 0
  %113 = vmatprep.subr.bf16.mxu0 0
  %114 = vmatpush1.bf16.msra.mxu0 0
  %115 = vmatprep.subr.bf16.mxu0 0
  %116 = vmatpush1.bf16.msra.mxu0 0
  %117 = vmatprep.subr.bf16.mxu0 0
  %118 = vmatpush1.bf16.msra.mxu0 0
  %119 = vmatprep.subr.bf16.mxu0 0
  %120 = vmatpush1.bf16.msra.mxu0 0
  %121 = vmatprep.subr.bf16.mxu0 0
  %122 = vmatpush1.bf16.msra.mxu0 0
  %123 = vmatprep.subr.bf16.mxu0 0
  %124 = vmatpush1.bf16.msra.mxu0 0
  %125 = vmatprep.subr.bf16.mxu0 0
  %126 = vmatpush1.bf16.msra.mxu0 0
  %127 = vmatprep.subr.bf16.mxu0 0
  %128 = vmatpush1.bf16.msra.mxu0 0
  %129 = vmatprep.subr.bf16.mxu0 0
  %130 = vmatpush1.bf16.msra.mxu0 0
  %131 = vmatprep.subr.bf16.mxu0 0
  %132 = vmatpush1.bf16.msra.mxu0 0
  %133 = vmatprep.subr.bf16.mxu0 0
  %134 = vmatpush1.bf16.msra.mxu0 0
  %135 = vmatprep.subr.bf16.mxu0 0
  %136 = vmatpush1.bf16.msra.mxu0 0
  %137 = vmatprep.mubr.bf16.mxu0 0
  %138 = vmatmul.mubr.bf16.gmra.mrb[0].mxu0 %v103
  %v139 = vpop.f32.mrb[0].mxu0
  %v140 = vadd.f32 %v87, %v139
  %v141 = vpop.f32.mrb[0].mxu0
  %v142 = vpop.f32.mrb[0].mxu0
  %v143 = vadd.f32 %v87, %v142
  %v144 = vpop.f32.mrb[0].mxu0
  %145 = vdwg.mxu0
  %v146 = vmul.f32 %v140, 0.5
  %v147 = vmul.f32 %v143, 0.5
  %v148 = vmul.f32 %v140, 0.70710677
  %v149 = vmul.f32 %v143, 0.70710677
  %v150 = verf.f32.pop %v148
  %v151 = verf.f32.pop %v149
  %v152 = vadd.f32 %v150, 1.0
  %v153 = vadd.f32 %v151, 1.0
  %v154 = vmul.f32 %v146, %v152
  %v155 = vmul.f32 %v147, %v153
  %v156 = vpack.c.bf16 %v155, %v154
  %v158 = vunpack.c.l.b16 %v156
  %v159 = vunpack.c.h.b16 %v156
  %v160 = vpack.c.b16 %v158, %v158
  %v161 = vpack.c.b16 %v159, %v159
  %vm164 = vcmask 519168
  %165 = vst.msk [vmem:[%s5] sm:$0xf] %vm164, %v160
  %166 = vst.msk [vmem:[%s5 + $0x4] sm:$0xf] %vm164, %v161
  // Predicated region
  $region26: #{forward.14} parent=0 // pred_check
    _
  $region27: #{forward.14} parent=0 // pred_check_branch
    %168 = sbr.rel (0) target = $region29
  $region28: #{forward.14} parent=0 // pred_region
    _
  $region29: #{forward.14} parent=0 // pred_fallthru
    _
  // Predicated region
  $region30: #{forward.14} parent=0 // pred_check
    _
  $region31: #{forward.14} parent=0 // pred_check_branch
    %170 = sbr.rel (0) target = $region33
  $region32: #{forward.14} parent=0 // pred_region
    _
  $region33: #{forward.14} parent=0 // pred_fallthru
    _

// kernel: forward.15
$region0: #{forward.15}
  #allocation0 [shape = 'u32[]', space=smem, size = 0x4, offset = 0x4, fixed_abs, tag = 'smem constant byte address 0x4 - core index']
  #allocation1 [shape = 'u32[144,128]{1,0:T(1,128)}', space=vmem, size = 0x12000, scoped, tag = 'internal scratch']
  #allocation2 [shape = 'f32[16,32]{1,0:T(8,128)}', space=vmem, size = 0x2000, scoped, tag = 'scratch operand']
  %s0 = inlined_call_operand.vmem [shape: bf16[16,64], index: 0, kind: input, shape index: {}]
  %s1 = inlined_call_operand.vmem [shape: bf16[64,32], index: 1, kind: input, shape index: {}]
  %s2 = inlined_call_operand.vmem [shape: f32[1,32], index: 2, kind: input, shape index: {}]
  %s3 = inlined_call_operand.vmem [shape: bf16[16,32], index: 3, kind: input, shape index: {}]
  %s4 = inlined_call_operand.vmem [shape: bf16[16,32], index: 4, kind: output, shape index: {}]
  %s5 = sld [smem:[#allocation0]]
  $region34: #{forward.15} parent=0
    _
  %s7 = ssub.s32 1, %s5
  %s8 = scalar_select 0, %s7, %s5
  // Predicated region
  $region2: #{forward.15} parent=0 // pred_check
    _
  $region3: #{forward.15} parent=0 // pred_check_branch
    %10 = sbr.rel (0) target = $region5
  $region4: #{forward.15} parent=0 // pred_region
    _
  $region5: #{forward.15} parent=0 // pred_fallthru
    _
  // Predicated region
  $region6: #{forward.15} parent=0 // pred_check
    _
  $region7: #{forward.15} parent=0 // pred_check_branch
    %12 = sbr.rel (0) target = $region9
  $region8: #{forward.15} parent=0 // pred_region
    _
  $region9: #{forward.15} parent=0 // pred_fallthru
    _
  // Predicated region
  $region10: #{forward.15} parent=0 // pred_check
    _
  $region11: #{forward.15} parent=0 // pred_check_branch
    %14 = sbr.rel (0) target = $region13
  $region12: #{forward.15} parent=0 // pred_region
    _
  $region13: #{forward.15} parent=0 // pred_fallthru
    _
  // Predicated region
  $region14: #{forward.15} parent=0 // pred_check
    _
  $region15: #{forward.15} parent=0 // pred_check_branch
    %16 = sbr.rel (0) target = $region17
  $region16: #{forward.15} parent=0 // pred_region
    _
  $region17: #{forward.15} parent=0 // pred_fallthru
    _
  %p18 = scmp.eq.s32.totalorder 0, 0
  // Predicated region
  $region18: #{forward.15} parent=0 // pred_check
    %p19 = pneg %p18
  $region19: #{forward.15} parent=0 // pred_check_branch
    %21 = sbr.rel (%p19) target = $region21
  $region20: #{forward.15} parent=0 // pred_region
    %vm22 = vcmask 261120
    %23 = vst.msk [vmem:[#allocation2] sm:$0xff] %vm22, 0.0
    %24 = vst.msk [vmem:[#allocation2 + $0x8] sm:$0xff] %vm22, 0.0
  $region21: #{forward.15} parent=0 // pred_fallthru
    _
  %v25 = vld [vmem:[#allocation2] sm:$0xff]
  %v26 = vld [vmem:[#allocation2 + $0x8] sm:$0xff]
  %v27 = vld [vmem:[%s0] sm:$0xf]
  %v28 = vld [vmem:[%s0 + $0x4] sm:$0xf]
  %v29 = vld [vmem:[%s1] sm:$0xf]
  %v30 = vld [vmem:[%s1 + $0x4] sm:$0xf]
  %v31 = vld [vmem:[%s1 + $0x8] sm:$0xf]
  %v32 = vld [vmem:[%s1 + $0xc] sm:$0xf]
  %v33 = vld [vmem:[%s1 + $0x10] sm:$0xf]
  %v34 = vld [vmem:[%s1 + $0x14] sm:$0xf]
  %v35 = vld [vmem:[%s1 + $0x18] sm:$0xf]
  %v36 = vld [vmem:[%s1 + $0x1c] sm:$0xf]
  %v39 = vunpack.c.l.b16 %v27
  %v40 = vunpack.c.l.b16 %v28
  %v41 = vpack.c.b16 %v40, %v39
  %v50 = vunpack.c.l.b16 %v29
  %v51 = vunpack.c.l.b16 %v30
  %v52 = vunpack.c.l.b16 %v31
  %v53 = vunpack.c.l.b16 %v32
  %v54 = vunpack.c.l.b16 %v33
  %v55 = vunpack.c.l.b16 %v34
  %v56 = vunpack.c.l.b16 %v35
  %v57 = vunpack.c.l.b16 %v36
  %v58 = vpack.c.b16 %v51, %v50
  %v59 = vpack.c.b16 %v53, %v52
  %v60 = vpack.c.b16 %v55, %v54
  %v61 = vpack.c.b16 %v57, %v56
  %vm66 = vcmask 523264
  %v68 = vsel %vm66, %v41, 0
  %70 = vmatprep.subr.bf16.mxu0 0
  %71 = vmatpush1.bf16.msra.mxu0 %v58
  %72 = vmatprep.subr.bf16.mxu0 0
  %73 = vmatpush1.bf16.msra.mxu0 %v59
  %74 = vmatprep.subr.bf16.mxu0 0
  %75 = vmatpush1.bf16.msra.mxu0 %v60
  %76 = vmatprep.subr.bf16.mxu0 0
  %77 = vmatpush1.bf16.msra.mxu0 %v61
  %78 = vmatprep.subr.bf16.mxu0 0
  %79 = vmatpush1.bf16.msra.mxu0 0
  %80 = vmatprep.subr.bf16.mxu0 0
  %81 = vmatpush1.bf16.msra.mxu0 0
  %82 = vmatprep.subr.bf16.mxu0 0
  %83 = vmatpush1.bf16.msra.mxu0 0
  %84 = vmatprep.subr.bf16.mxu0 0
  %85 = vmatpush1.bf16.msra.mxu0 0
  %86 = vmatprep.subr.bf16.mxu0 0
  %87 = vmatpush1.bf16.msra.mxu0 0
  %88 = vmatprep.subr.bf16.mxu0 0
  %89 = vmatpush1.bf16.msra.mxu0 0
  %90 = vmatprep.subr.bf16.mxu0 0
  %91 = vmatpush1.bf16.msra.mxu0 0
  %92 = vmatprep.subr.bf16.mxu0 0
  %93 = vmatpush1.bf16.msra.mxu0 0
  %94 = vmatprep.subr.bf16.mxu0 0
  %95 = vmatpush1.bf16.msra.mxu0 0
  %96 = vmatprep.subr.bf16.mxu0 0
  %97 = vmatpush1.bf16.msra.mxu0 0
  %98 = vmatprep.subr.bf16.mxu0 0
  %99 = vmatpush1.bf16.msra.mxu0 0
  %100 = vmatprep.subr.bf16.mxu0 0
  %101 = vmatpush1.bf16.msra.mxu0 0
  %102 = vmatprep.mubr.bf16.mxu0 0
  %103 = vmatmul.mubr.bf16.gmra.mrb[0].mxu0 %v68
  %v104 = vpop.f32.mrb[0].mxu0
  %v105 = vadd.f32 0.0, %v104
  %v106 = vpop.f32.mrb[0].mxu0
  %v107 = vpop.f32.mrb[0].mxu0
  %v108 = vadd.f32 0.0, %v107
  %v109 = vpop.f32.mrb[0].mxu0
  %110 = vdwg.mxu0
  %v111 = vadd.f32 %v25, %v105
  %v112 = vadd.f32 %v26, %v108
  %vm113 = vcmask 261120
  %114 = vst.msk [vmem:[#allocation2] sm:$0xff] %vm113, %v111
  %115 = vst.msk [vmem:[#allocation2 + $0x8] sm:$0xff] %vm113, %v112
  // Predicated region
  $region22: #{forward.15} parent=0 // pred_check
    %p116 = pneg %p18
  $region23: #{forward.15} parent=0 // pred_check_branch
    %118 = sbr.rel (%p116) target = $region25
  $region24: #{forward.15} parent=0 // pred_region
    %v119 = vld [vmem:[#allocation2] sm:$0xff]
    %v120 = vld [vmem:[#allocation2 + $0x8] sm:$0xff]
    %v121 = vld [vmem:[%s2] sm:$0x1]
    %v123 = vlaneseq
    %v124 = vshrl.u32 %v123, 7
    %v125 = vsub.s32 0, %v124
    %v126 = vrot.slane %v121, %v125
    %v128 = vadd.f32 %v119, %v126
    %v129 = vadd.f32 %v120, %v126
    %v130 = vld [vmem:[%s3] sm:$0xf]
    %v131 = vld [vmem:[%s3 + $0x4] sm:$0xf]
    %v132 = vunpack.c.l.bf16 %v130
    %v133 = vunpack.c.l.bf16 %v131
    %v134 = vadd.f32 %v128, %v132
    %v135 = vadd.f32 %v129, %v133
    %v136 = vpack.c.bf16 %v135, %v134
    %v138 = vunpack.c.l.b16 %v136
    %v139 = vunpack.c.h.b16 %v136
    %v140 = vpack.c.b16 %v138, %v138
    %v141 = vpack.c.b16 %v139, %v139
    %vm144 = vcmask 257024
    %145 = vst.msk [vmem:[%s4] sm:$0xf] %vm144, %v140
    %146 = vst.msk [vmem:[%s4 + $0x4] sm:$0xf] %vm144, %v141
  $region25: #{forward.15} parent=0 // pred_fallthru
    _
  // Predicated region
  $region26: #{forward.15} parent=0 // pred_check
    _
  $region27: #{forward.15} parent=0 // pred_check_branch
    %148 = sbr.rel (0) target = $region29
  $region28: #{forward.15} parent=0 // pred_region
    _
  $region29: #{forward.15} parent=0 // pred_fallthru
    _
  // Predicated region
  $region30: #{forward.15} parent=0 // pred_check
    _
  $region31: #{forward.15} parent=0 // pred_check_branch
    %150 = sbr.rel (0) target = $region33
  $region32: #{forward.15} parent=0 // pred_region
    _
  $region33: #{forward.15} parent=0 // pred_fallthru
    _

// kernel: forward.21
$region0: #{forward.21}
  #allocation0 [shape = 'u32[]', space=smem, size = 0x4, offset = 0x4, fixed_abs, tag = 'smem constant byte address 0x4 - core index']
  #allocation1 [shape = 'u32[144,128]{1,0:T(1,128)}', space=vmem, size = 0x12000, scoped, tag = 'internal scratch']
  #allocation2 [shape = 'bf16[16,32]{1,0:T(16,128)(2,1)}', space=vmem, size = 0x1000, scoped, tag = 'scratch operand']
  %s0 = inlined_call_operand.vmem [shape: bf16[16,32], index: 0, kind: input, shape index: {}]
  %s1 = inlined_call_operand.vmem [shape: f32[1,32], index: 1, kind: input, shape index: {}]
  %s2 = inlined_call_operand.vmem [shape: f32[1,32], index: 2, kind: input, shape index: {}]
  %s3 = inlined_call_operand.vmem [shape: bf16[32,128], index: 3, kind: input, shape index: {}]
  %s4 = inlined_call_operand.vmem [shape: f32[1,128], index: 4, kind: input, shape index: {}]
  %s5 = inlined_call_operand.hbm [shape: f32[16,128], index: 5, kind: output, shape index: {}]
  %s6 = sld [smem:[#allocation0]]
  $region34: #{forward.21} parent=0
    _
  %s8 = ssub.s32 1, %s6
  %s9 = scalar_select 0, %s8, %s6
  $region1: #{forward.21} parent=0
    #allocation3 [shape = 'u8[8192]{0}', space=vmem, size = 0x2000, scoped, tag = 'output window, operand 0, single buffered']
    #allocation4 [shape = 's32[1]{0}', space=sflag, size = 0x4, scoped, tag = 'scoped memory for forward.21']
    %10 = vsyncpa [#allocation4], 0
    // Predicated region
    $region2: #{forward.21} parent=1 // pred_check
      _
    $region3: #{forward.21} parent=1 // pred_check_branch
      %12 = sbr.rel (0) target = $region5
    $region4: #{forward.21} parent=1 // pred_region
      _
    $region5: #{forward.21} parent=1 // pred_fallthru
      _
    // Predicated region
    $region6: #{forward.21} parent=1 // pred_check
      _
    $region7: #{forward.21} parent=1 // pred_check_branch
      %14 = sbr.rel (0) target = $region9
    $region8: #{forward.21} parent=1 // pred_region
      _
    $region9: #{forward.21} parent=1 // pred_fallthru
      _
    // Predicated region
    $region10: #{forward.21} parent=1 // pred_check
      _
    $region11: #{forward.21} parent=1 // pred_check_branch
      %16 = sbr.rel (0) target = $region13
    $region12: #{forward.21} parent=1 // pred_region
      _
    $region13: #{forward.21} parent=1 // pred_fallthru
      _
    // Predicated region
    $region14: #{forward.21} parent=1 // pred_check
      _
    $region15: #{forward.21} parent=1 // pred_check_branch
      %18 = sbr.rel (0) target = $region17
    $region16: #{forward.21} parent=1 // pred_region
      _
    $region17: #{forward.21} parent=1 // pred_fallthru
      _
    // Predicated region
    $region18: #{forward.21} parent=1 // pred_check
      _
    $region19: #{forward.21} parent=1 // pred_check_branch
      %20 = sbr.rel (0) target = $region21
    $region20: #{forward.21} parent=1 // pred_region
      _
    $region21: #{forward.21} parent=1 // pred_fallthru
      _
    %p22 = scmp.eq.s32.totalorder 0, 0
    // Predicated region
    $region22: #{forward.21} parent=1 // pred_check
      %p23 = pneg %p22
    $region23: #{forward.21} parent=1 // pred_check_branch
      %25 = sbr.rel (%p23) target = $region25
    $region24: #{forward.21} parent=1 // pred_region
      %v26 = vld [vmem:[%s0] sm:$0xf]
      %v27 = vld [vmem:[%s0 + $0x4] sm:$0xf]
      %v28 = vunpack.c.l.bf16 %v26
      %v29 = vunpack.c.l.bf16 %v27
      %vm30 = vcmask 261120
      %v31 = vsel %vm30, %v28, 0.0
      %32 = vadd.xlane.f32.xlu0 %v31
      %v33 = vpop.xlane.xlu0 %32
      %v34 = vsel %vm30, %v29, 0.0
      %35 = vadd.xlane.f32.xlu0 %v34
      %v36 = vpop.xlane.xlu0 %35
      %v37 = vrcp.pop 32.0
      %v38 = vmul.f32 %v33, %v37
      %v39 = vmul.f32 %v36, %v37
      %v40 = vsub.f32 %v28, %v38
      %v41 = vsub.f32 %v29, %v39
      %v42 = vmul.f32 %v40, %v40
      %v43 = vmul.f32 %v41, %v41
      %v44 = vsel %vm30, %v42, 0.0
      %45 = vadd.xlane.f32.xlu0 %v44
      %v46 = vpop.xlane.xlu0 %45
      %v47 = vsel %vm30, %v43, 0.0
      %48 = vadd.xlane.f32.xlu0 %v47
      %v49 = vpop.xlane.xlu0 %48
      %v50 = vmul.f32 %v46, %v37
      %v51 = vmul.f32 %v49, %v37
      %v52 = vadd.f32 %v50, 1e-05
      %v53 = vadd.f32 %v51, 1e-05
      %v54 = vrsqrt.pop %v52
      %v55 = vrsqrt.pop %v53
      %v56 = vmul.f32 %v40, %v54
      %v57 = vmul.f32 %v41, %v55
      %v58 = vld [vmem:[%s1] sm:$0x1]
      %v60 = vlaneseq
      %v61 = vshrl.u32 %v60, 7
      %v62 = vsub.s32 0, %v61
      %v63 = vrot.slane %v58, %v62
      %v65 = vmul.f32 %v56, %v63
      %v66 = vmul.f32 %v57, %v63
      %v67 = vld [vmem:[%s2] sm:$0x1]
      %v69 = vlaneseq
      %v70 = vshrl.u32 %v69, 7
      %v71 = vsub.s32 0, %v70
      %v72 = vrot.slane %v67, %v71
      %v74 = vadd.f32 %v65, %v72
      %v75 = vadd.f32 %v66, %v72
      %v76 = vpack.c.bf16 %v75, %v74
      %77 = vst.msk [vmem:[#allocation2] sm:$0xff] %vm30, %v76
    $region25: #{forward.21} parent=1 // pred_fallthru
      _
    %v78 = vld [vmem:[#allocation2] sm:$0xff]
    %v79 = vld [vmem:[%s3] sm:$0xf]
    %v80 = vld [vmem:[%s3 + $0x4] sm:$0xf]
    %v81 = vld [vmem:[%s3 + $0x8] sm:$0xf]
    %v82 = vld [vmem:[%s3 + $0xc] sm:$0xf]
    %v83 = vld [vmem:[%s4] sm:$0x1]
    %v85 = vlaneseq
    %v86 = vshrl.u32 %v85, 7
    %v87 = vsub.s32 0, %v86
    %v88 = vrot.slane %v83, %v87
    %v94 = vunpack.c.l.b16 %v79
    %v95 = vunpack.c.l.b16 %v80
    %v96 = vunpack.c.l.b16 %v81
    %v97 = vunpack.c.l.b16 %v82
    %v98 = vpack.c.b16 %v95, %v94
    %v99 = vpack.c.b16 %v97, %v96
    %vm102 = vcmask 261120
    %v104 = vsel %vm102, %v78, 0
    %106 = vmatprep.subr.bf16.mxu0 0
    %107 = vmatpush1.bf16.msra.mxu0 %v98
    %108 = vmatprep.subr.bf16.mxu0 0
    %109 = vmatpush1.bf16.msra.mxu0 %v99
    %110 = vmatprep.subr.bf16.mxu0 0
    %111 = vmatpush1.bf16.msra.mxu0 0
    %112 = vmatprep.subr.bf16.mxu0 0
    %113 = vmatpush1.bf16.msra.mxu0 0
    %114 = vmatprep.subr.bf16.mxu0 0
    %115 = vmatpush1.bf16.msra.mxu0 0
    %116 = vmatprep.subr.bf16.mxu0 0
    %117 = vmatpush1.bf16.msra.mxu0 0
    %118 = vmatprep.subr.bf16.mxu0 0
    %119 = vmatpush1.bf16.msra.mxu0 0
    %120 = vmatprep.subr.bf16.mxu0 0
    %121 = vmatpush1.bf16.msra.mxu0 0
    %122 = vmatprep.subr.bf16.mxu0 0
    %123 = vmatpush1.bf16.msra.mxu0 0
    %124 = vmatprep.subr.bf16.mxu0 0
    %125 = vmatpush1.bf16.msra.mxu0 0
    %126 = vmatprep.subr.bf16.mxu0 0
    %127 = vmatpush1.bf16.msra.mxu0 0
    %128 = vmatprep.subr.bf16.mxu0 0
    %129 = vmatpush1.bf16.msra.mxu0 0
    %130 = vmatprep.subr.bf16.mxu0 0
    %131 = vmatpush1.bf16.msra.mxu0 0
    %132 = vmatprep.subr.bf16.mxu0 0
    %133 = vmatpush1.bf16.msra.mxu0 0
    %134 = vmatprep.subr.bf16.mxu0 0
    %135 = vmatpush1.bf16.msra.mxu0 0
    %136 = vmatprep.subr.bf16.mxu0 0
    %137 = vmatpush1.bf16.msra.mxu0 0
    %138 = vmatprep.mubr.bf16.mxu0 0
    %139 = vmatmul.mubr.bf16.gmra.mrb[0].mxu0 %v104
    %v140 = vpop.f32.mrb[0].mxu0
    %v141 = vadd.f32 %v88, %v140
    %v142 = vpop.f32.mrb[0].mxu0
    %v143 = vpop.f32.mrb[0].mxu0
    %v144 = vadd.f32 %v88, %v143
    %v145 = vpop.f32.mrb[0].mxu0
    %146 = vdwg.mxu0
    %147 = vst [vmem:[#allocation3] sm:$0xff] %v141
    %148 = vst [vmem:[#allocation3 + $0x8] sm:$0xff] %v144
    // Predicated region
    $region26: #{forward.21} parent=1 // pred_check
      _
    $region27: #{forward.21} parent=1 // pred_check_branch
      %150 = sbr.rel (0) target = $region29
    $region28: #{forward.21} parent=1 // pred_region
      %s152 = ssub.s32 256, 256
      %153 = vsyncadd [#allocation4], %s152
      %s154 = sshll.u32 [#allocation3], 4
      %s155 = int_to_ptr.vmem [resolvable:$true] %s154
      %160 = dma.vmem_to_hbm [thread:$0]  %s155, 256, %s5, [#allocation4], 128, 128, 8
    $region29: #{forward.21} parent=1 // pred_fallthru
      _
    // Predicated region
    $region30: #{forward.21} parent=1 // pred_check
      _
    $region31: #{forward.21} parent=1 // pred_check_branch
      %162 = sbr.rel (0) target = $region33
    $region32: #{forward.21} parent=1 // pred_region
      %163 = dma.done [#allocation4], 256
    $region33: #{forward.21} parent=1 // pred_fallthru
      _
    %164 = vsyncpa [#allocation4], 1

</llo_original>
